<compile_context>
chip_gen: v7x
topology: tpu7x:2x2x1
jax: 0.10.0
libtpu: 0.0.40
codegen_flags: <defaults>
</compile_context>

<pallas_src>
import math
import functools

import jax
import jax.numpy as jnp
from jax import lax
from jax.experimental import pallas as pl
from jax.experimental.pallas import tpu as pltpu


# -----------------------------------------------------------------------------
# Kernel 1: transformer body -> last-timestep hidden state
# -----------------------------------------------------------------------------
def _body_kernel(
    x_ref,                                   # (TB, S, D)  f32  embedding + PE
    wk1_ref, wv1_ref, wo1_ref,               # (D, D)      bf16
    w11_ref, w21_ref,                        # (D, H), (H, D)
    wk2_ref, wv2_ref, wo2_ref,               # (D, D)
    w12_ref, w22_ref,                        # (D, H), (H, D)
    hlast_ref,                               # (1, TB, D)  f32 output block
    *, compute_dtype,
):
    f32 = jnp.float32
    x = x_ref[...].astype(f32)               # (TB, S, D)
    TB, S, D = x.shape
    inv_sqrt_d = f32(1.0 / math.sqrt(D))

    # Causal mask built in-kernel (no HBM mask DMA) and fused into the scores
    # with a single select (no separate (S,S) bias temp / broadcast add).
    q_idx = lax.broadcasted_iota(jnp.int32, (S, S), 0)
    k_idx = lax.broadcasted_iota(jnp.int32, (S, S), 1)
    causal = k_idx <= q_idx                                     # (S, S)

    def attention(h, wk_ref, wv_ref, wo_ref):
        # W_q is identity: q = h.
        h2 = h.reshape(TB * S, D).astype(compute_dtype)
        k = jnp.dot(h2, wk_ref[...],
                    preferred_element_type=f32).reshape(TB, S, D)
        v = jnp.dot(h2, wv_ref[...],
                    preferred_element_type=f32).reshape(TB, S, D)
        # Batched q @ k^T without materializing a transpose.
        scores = jnp.einsum(
            "bqd,bkd->bqk",
            h.astype(compute_dtype), k.astype(compute_dtype),
            preferred_element_type=f32) * inv_sqrt_d
        scores = jnp.where(causal, scores, f32(-1e30))          # fused mask
        # Numerically stable softmax; normalization deferred to the context
        # (scale TB*S*D elements instead of TB*S*S) via EUP approx reciprocal.
        m = jnp.max(scores, axis=-1, keepdims=True)
        e = jnp.exp(scores - m)
        denom = jnp.sum(e, axis=-1, keepdims=True)
        ctx = jnp.einsum(
            "bqk,bkd->bqd",
            e.astype(compute_dtype), v.astype(compute_dtype),
            preferred_element_type=f32)                         # (TB, S, D)
        ctx = ctx * pl.reciprocal(denom, approx=True)
        out = jnp.dot(ctx.reshape(TB * S, D).astype(compute_dtype),
                      wo_ref[...], preferred_element_type=f32)
        return out.reshape(TB, S, D)

    def ffn(h, w1_ref, w2_ref):
        hid = jnp.dot(h.reshape(TB * S, D).astype(compute_dtype),
                      w1_ref[...], preferred_element_type=f32)
        hid = jnp.maximum(hid, 0.0)                             # relu=True
        out = jnp.dot(hid.astype(compute_dtype), w2_ref[...],
                      preferred_element_type=f32)
        return out.reshape(TB, S, D)

    # --- block 1 ---
    h = x + attention(x, wk1_ref, wv1_ref, wo1_ref)
    h = h + ffn(h, w11_ref, w21_ref)
    # --- block 2 ---
    h = h + attention(h, wk2_ref, wv2_ref, wo2_ref)
    h = h + ffn(h, w12_ref, w22_ref)

    hlast_ref[...] = h[:, S - 1, :][None, :, :]                 # (1, TB, D)


# -----------------------------------------------------------------------------
# Kernel 2: output head GEMM (B, D) @ (D, V)
# -----------------------------------------------------------------------------
def _head_kernel(h_ref, w_ref, o_ref, *, compute_dtype):
    o_ref[...] = jnp.dot(
        h_ref[...].astype(compute_dtype), w_ref[...],
        preferred_element_type=jnp.float32).astype(o_ref.dtype)


# -----------------------------------------------------------------------------
# Wrapper
# -----------------------------------------------------------------------------
def _vmem_limit_bytes():
    """Per-generation VMEM budget with headroom for compiler scratch."""
    cap = 128 * 1024 * 1024
    try:
        cap = int(pltpu.get_tpu_info().vmem_capacity_bytes)
    except Exception:
        pass
    # 128 MiB chips (v5e/v6e) -> 112 MiB; 64 MiB chips (v7x) -> 52 MiB.
    return int(max(32 * 1024 * 1024,
                   min(cap - 12 * 1024 * 1024, 112 * 1024 * 1024)))


def bayesian_transformer_forward(tokens, params, compute_dtype=jnp.bfloat16):
    """tokens: (B, S) int32.  params: dict of f32 weights (see init_params)."""
    B, S = tokens.shape
    emb = params["tok_embeddings"]          # (vocab, D)
    pe = params["pe"]                       # (max_seq_len, D)
    D = emb.shape[1]
    H = params["w11"].shape[1]
    V = params["wout"].shape[1]

    # Glue: embedding gather + positional encoding (not a matmul hot path).
    # TODO(synk): on v5e, feed this as bf16 (upcast in-kernel) to halve the
    # activation DMA; kept f32 here for accuracy headroom.
    h = (emb[tokens] + pe[:S, :][None, :, :]).astype(jnp.float32)  # (B, S, D)

    # ---- batch tiling: ~512 flattened rows per matmul, >=2 tiles (megacore) -
    TB = min(B, max(1, 512 // S))
    if B >= 2:
        TB = min(TB, -(-B // 2))            # guarantee n_bt >= 2 for v7x
    n_bt = -(-B // TB)
    B_pad = n_bt * TB
    if B_pad != B:
        h = jnp.pad(h, ((0, B_pad - B), (0, 0), (0, 0)))

    # bf16 weights: halves weight DMA bytes + VMEM; matmuls accumulate in f32.
    wnames = ["wk1", "wv1", "wo1", "w11", "w21",
              "wk2", "wv2", "wo2", "w12", "w22"]
    weights = [params[n].astype(compute_dtype) for n in wnames]

    vmem_limit = _vmem_limit_bytes()

    # Block-invariant weights: single-buffered (never re-DMA'd, and a second
    # buffer would only waste VMEM).
    def _full(arr):
        return pl.BlockSpec(arr.shape, lambda bi: (0,) * arr.ndim,
                            pipeline_mode=pl.Buffered(1))

    body_flops = 4 * (B_pad * S * (3 * D * D + 2 * D * H)
                      + 2 * B_pad * S * S * D)
    body_bytes = (B_pad * S * D * 4
                  + 2 * (3 * D * D + 2 * D * H) * 2
                  + B_pad * D * 4)
    body_trans = 2 * B_pad * S * S

    hlast = pl.pallas_call(
        functools.partial(_body_kernel, compute_dtype=compute_dtype),
        out_shape=jax.ShapeDtypeStruct((n_bt, TB, D), jnp.float32),
        grid=(n_bt,),
        in_specs=(
            [pl.BlockSpec((TB, S, D), lambda bi: (bi, 0, 0))]      # x
            + [_full(w) for w in weights]                          # weights
        ),
        out_specs=pl.BlockSpec((1, TB, D), lambda bi: (bi, 0, 0)),
        compiler_params=pltpu.CompilerParams(
            dimension_semantics=("parallel",),
            vmem_limit_bytes=vmem_limit,
        ),
        cost_estimate=pl.CostEstimate(
            flops=int(body_flops), transcendentals=int(body_trans),
            bytes_accessed=int(body_bytes)),
    )(h, *weights)

    hlast = hlast.reshape(B_pad, D)                                # (B_pad, D)

    # ---- output head: lane-dense, vocab-tiled GEMM over the whole batch ----
    LANE = 128
    V_pad = -(-V // LANE) * LANE
    TV = LANE
    for cand in (2048, 1024, 512, 256):
        if V_pad % cand == 0:
            TV = cand
            break
    n_vt = V_pad // TV

    wout = params["wout"]
    if V_pad != V:
        wout = jnp.pad(wout, ((0, 0), (0, V_pad - V)))
    wout = wout.astype(compute_dtype)

    if B_pad <= 512:
        TM = B_pad                        # one M tile -> wout streamed once
    else:
        TM = 512
    B_head = -(-B_pad // TM) * TM
    if B_head != B_pad:
        hlast = jnp.pad(hlast, ((0, B_head - B_pad), (0, 0)))
    n_m = B_head // TM

    head_flops = 2 * B_head * D * V_pad
    head_bytes = B_head * D * 4 + D * V_pad * 2 + B_head * V_pad * 4

    logits = pl.pallas_call(
        functools.partial(_head_kernel, compute_dtype=compute_dtype),
        out_shape=jax.ShapeDtypeStruct((B_head, V_pad), jnp.float32),
        grid=(n_m, n_vt),
        in_specs=[
            pl.BlockSpec((TM, D), lambda mi, vj: (mi, 0)),
            pl.BlockSpec((D, TV), lambda mi, vj: (0, vj)),
        ],
        out_specs=pl.BlockSpec((TM, TV), lambda mi, vj: (mi, vj)),
        compiler_params=pltpu.CompilerParams(
            dimension_semantics=("parallel", "parallel"),
            vmem_limit_bytes=vmem_limit,
        ),
        cost_estimate=pl.CostEstimate(
            flops=int(head_flops), transcendentals=0,
            bytes_accessed=int(head_bytes)),
    )(hlast, wout)

    return logits[:B, :V]


# -----------------------------------------------------------------------------
# Deterministic parameter construction
# -----------------------------------------------------------------------------
def init_params(key, vocab_size, d_model, max_seq_len, mlp_multiplier=4):
    hidden = d_model * mlp_multiplier
    keys = jax.random.split(key, 16)
    ki = iter(keys)

    def bayes_linear(k, in_f, out_f):
        # BayesLinear: W = mu + exp(log_sigma) * eps, sampled once here.
        k_mu, k_eps = jax.random.split(k)
        bound = 1.0 / math.sqrt(in_f)
        mu = jax.random.uniform(k_mu, (out_f, in_f), jnp.float32, -bound, bound)
        log_sigma = jnp.full((out_f, in_f), -5.0, jnp.float32)
        eps = jax.random.normal(k_eps, (out_f, in_f), jnp.float32)
        w = mu + jnp.exp(log_sigma) * eps
        return w.T  # pre-transpose to (in, out) for x @ W in the kernel

    params = {}
    params["tok_embeddings"] = jax.random.normal(
        next(ki), (vocab_size, d_model), jnp.float32)

    # Sinusoidal positional encoding, identical to the PyTorch construction.
    position = jnp.arange(max_seq_len, dtype=jnp.float32)[:, None]
    div_term = jnp.exp(
        jnp.arange(0, d_model, 2, dtype=jnp.float32)
        * (-math.log(10000.0) / d_model))
    pe = jnp.zeros((max_seq_len, d_model), jnp.float32)
    pe = pe.at[:, 0::2].set(jnp.sin(position * div_term))
    pe = pe.at[:, 1::2].set(jnp.cos(position * div_term))
    params["pe"] = pe

    # Block 1
    params["wk1"] = bayes_linear(next(ki), d_model, d_model)
    params["wv1"] = bayes_linear(next(ki), d_model, d_model)
    params["wo1"] = bayes_linear(next(ki), d_model, d_model)
    params["w11"] = bayes_linear(next(ki), d_model, hidden)
    params["w21"] = bayes_linear(next(ki), hidden, d_model)
    # Block 2
    params["wk2"] = bayes_linear(next(ki), d_model, d_model)
    params["wv2"] = bayes_linear(next(ki), d_model, d_model)
    params["wo2"] = bayes_linear(next(ki), d_model, d_model)
    params["w12"] = bayes_linear(next(ki), d_model, hidden)
    params["w22"] = bayes_linear(next(ki), hidden, d_model)
    # Output head: nn.Linear(d_model, vocab, bias=False) -> (vocab, d_model),
    # pre-transposed to (d_model, vocab).
    bound = 1.0 / math.sqrt(d_model)
    params["wout"] = jax.random.uniform(
        next(ki), (vocab_size, d_model), jnp.float32, -bound, bound).T

    return params


# -----------------------------------------------------------------------------
# Pure-JAX (f32) reference for a sanity check
# -----------------------------------------------------------------------------
def reference_forward(tokens, params):
    B, S = tokens.shape
    h = params["tok_embeddings"][tokens] + params["pe"][:S][None]
    mask = jnp.triu(jnp.full((S, S), -1e30, jnp.float32), k=1)
    d = h.shape[-1]

    def attn(x, wk, wv, wo):
        k = x @ wk
        v = x @ wv
        s = jnp.einsum("bqd,bkd->bqk", x, k) / math.sqrt(d) + mask
        a = jax.nn.softmax(s, axis=-1)
        return jnp.einsum("bqk,bkd->bqd", a, v) @ wo

    def ffn(x, w1, w2):
        return jnp.maximum(x @ w1, 0.0) @ w2

    h = h + attn(h, params["wk1"], params["wv1"], params["wo1"])
    h = h + ffn(h, params["w11"], params["w21"])
    h = h + attn(h, params["wk2"], params["wv2"], params["wo2"])
    h = h + ffn(h, params["w12"], params["w22"])
    return h[:, -1, :] @ params["wout"]


if __name__ == "__main__":
    vocab_size = 16
    d_model = 32
    max_seq_len = 8
    batch = 2
    seq_len = 8

    key = jax.random.PRNGKey(0)
    k_params, k_tok = jax.random.split(key)
    params = init_params(k_params, vocab_size, d_model, max_seq_len)
    tokens = jax.random.randint(k_tok, (batch, seq_len), 0, vocab_size,
                                dtype=jnp.int32)

    logits = bayesian_transformer_forward(tokens, params)
    logits = jax.block_until_ready(logits)

    ref = reference_forward(tokens, params)
    assert logits.shape == (batch, vocab_size)
    # Kernel uses bf16 matmul inputs (f32 accumulation) + approx reciprocal,
    # so compare against the pure-f32 reference with a mixed-precision
    # tolerance.
    assert jnp.allclose(logits, ref, atol=7.5e-2, rtol=5e-2), (
        "mismatch vs reference")

    print("KERNEL_OK")
</pallas_src>

<mosaic_0001>
module attributes {stable_mosaic.version = 11 : i64} {
  func.func @_body_kernel(%arg0: i32, %arg1: memref<1x8x32xf32, #tpu.memory_space<vmem>>, %arg2: memref<32x32xbf16, #tpu.memory_space<vmem>>, %arg3: memref<32x32xbf16, #tpu.memory_space<vmem>>, %arg4: memref<32x32xbf16, #tpu.memory_space<vmem>>, %arg5: memref<32x128xbf16, #tpu.memory_space<vmem>>, %arg6: memref<128x32xbf16, #tpu.memory_space<vmem>>, %arg7: memref<32x32xbf16, #tpu.memory_space<vmem>>, %arg8: memref<32x32xbf16, #tpu.memory_space<vmem>>, %arg9: memref<32x32xbf16, #tpu.memory_space<vmem>>, %arg10: memref<32x128xbf16, #tpu.memory_space<vmem>>, %arg11: memref<128x32xbf16, #tpu.memory_space<vmem>>, %arg12: memref<1x1x32xf32, #tpu.memory_space<vmem>>) attributes {dimension_semantics = [#tpu.dimension_semantics<parallel>], iteration_bounds = array<i64: 2>, scalar_prefetch = 0 : i64, scratch_operands = 0 : i64, tpu.core_type = #tpu.core_type<tc>, window_params = [{transform_indices = @transform_0, window_bounds = array<i64: 1, 8, 32>}, {pipeline_mode = #tpu.pipeline_mode<synchronous>, transform_indices = @transform_1, window_bounds = array<i64: 32, 32>}, {pipeline_mode = #tpu.pipeline_mode<synchronous>, transform_indices = @transform_2, window_bounds = array<i64: 32, 32>}, {pipeline_mode = #tpu.pipeline_mode<synchronous>, transform_indices = @transform_3, window_bounds = array<i64: 32, 32>}, {pipeline_mode = #tpu.pipeline_mode<synchronous>, transform_indices = @transform_4, window_bounds = array<i64: 32, 128>}, {pipeline_mode = #tpu.pipeline_mode<synchronous>, transform_indices = @transform_5, window_bounds = array<i64: 128, 32>}, {pipeline_mode = #tpu.pipeline_mode<synchronous>, transform_indices = @transform_6, window_bounds = array<i64: 32, 32>}, {pipeline_mode = #tpu.pipeline_mode<synchronous>, transform_indices = @transform_7, window_bounds = array<i64: 32, 32>}, {pipeline_mode = #tpu.pipeline_mode<synchronous>, transform_indices = @transform_8, window_bounds = array<i64: 32, 32>}, {pipeline_mode = #tpu.pipeline_mode<synchronous>, transform_indices = @transform_9, window_bounds = array<i64: 32, 128>}, {pipeline_mode = #tpu.pipeline_mode<synchronous>, transform_indices = @transform_10, window_bounds = array<i64: 128, 32>}, {transform_indices = @transform_11, window_bounds = array<i64: 1, 1, 32>}]} {
    %c0 = arith.constant 0 : index
    %c0_0 = arith.constant 0 : index
    %c0_1 = arith.constant 0 : index
    %0 = vector.load %arg1[%c0, %c0_0, %c0_1] : memref<1x8x32xf32, #tpu.memory_space<vmem>>, vector<1x8x32xf32>
    %1 = tpu.iota {dimensions = array<i32: 0>} : vector<8x8xi32>
    %2 = tpu.iota {dimensions = array<i32: 1>} : vector<8x8xi32>
    %3 = arith.cmpi sle, %2, %1 : vector<8x8xi32>
    %4 = vector.shape_cast %0 : vector<1x8x32xf32> to vector<8x32xf32>
    %5 = arith.truncf %4 : vector<8x32xf32> to vector<8x32xbf16>
    %c0_2 = arith.constant 0 : index
    %c0_3 = arith.constant 0 : index
    %6 = vector.load %arg2[%c0_2, %c0_3] : memref<32x32xbf16, #tpu.memory_space<vmem>>, vector<32x32xbf16>
    %cst = arith.constant dense<0.000000e+00> : vector<8x32xf32>
    %7 = tpu.matmul %5, %6, %cst {dimension_numbers = #tpu.dot_dimension_numbers<[1], [0], [0], [1], [0, 0, 1, 1], [], []>} : vector<8x32xbf16>, vector<32x32xbf16>, vector<8x32xf32> -> vector<8x32xf32>
    %8 = vector.shape_cast %7 : vector<8x32xf32> to vector<1x8x32xf32>
    %c0_4 = arith.constant 0 : index
    %c0_5 = arith.constant 0 : index
    %9 = vector.load %arg3[%c0_4, %c0_5] : memref<32x32xbf16, #tpu.memory_space<vmem>>, vector<32x32xbf16>
    %cst_6 = arith.constant dense<0.000000e+00> : vector<8x32xf32>
    %10 = tpu.matmul %5, %9, %cst_6 {dimension_numbers = #tpu.dot_dimension_numbers<[1], [0], [0], [1], [0, 0, 1, 1], [], []>} : vector<8x32xbf16>, vector<32x32xbf16>, vector<8x32xf32> -> vector<8x32xf32>
    %11 = vector.shape_cast %10 : vector<8x32xf32> to vector<1x8x32xf32>
    %12 = arith.truncf %0 : vector<1x8x32xf32> to vector<1x8x32xbf16>
    %13 = arith.truncf %8 : vector<1x8x32xf32> to vector<1x8x32xbf16>
    "tpu.trace_start"() <{level = 10 : i32, message = "bqd,bkd->bqk"}> : () -> ()
    %cst_7 = arith.constant dense<0.000000e+00> : vector<1x8x8xf32>
    %14 = tpu.matmul %12, %13, %cst_7 {dimension_numbers = #tpu.dot_dimension_numbers<[2], [2], [1], [1], [0, 0, 0, 1, 1, 1], [0], [0]>} : vector<1x8x32xbf16>, vector<1x8x32xbf16>, vector<1x8x8xf32> -> vector<1x8x8xf32>
    "tpu.trace_stop"() : () -> ()
    %cst_8 = arith.constant 0.176776692 : f32
    %15 = vector.broadcast %cst_8 : f32 to vector<1x8x8xf32>
    %16 = arith.mulf %14, %15 : vector<1x8x8xf32>
    %cst_9 = arith.constant -1.000000e+30 : f32
    %17 = vector.shape_cast %3 : vector<8x8xi1> to vector<1x8x8xi1>
    %18 = vector.broadcast %cst_9 : f32 to vector<1x8x8xf32>
    %19 = arith.select %17, %16, %18 : vector<1x8x8xi1>, vector<1x8x8xf32>
    %cst_10 = arith.constant dense<0xFF800000> : vector<1x8xf32>
    %20 = vector.multi_reduction <maximumf>, %19, %cst_10 [2] : vector<1x8x8xf32> to vector<1x8xf32>
    %21 = vector.shape_cast %20 : vector<1x8xf32> to vector<1x8x1xf32>
    %22 = vector.broadcast %21 : vector<1x8x1xf32> to vector<1x8x8xf32>
    %23 = arith.subf %19, %22 : vector<1x8x8xf32>
    %24 = math.exp %23 : vector<1x8x8xf32>
    %cst_11 = arith.constant dense<0.000000e+00> : vector<1x8xf32>
    %25 = vector.multi_reduction <add>, %24, %cst_11 [2] : vector<1x8x8xf32> to vector<1x8xf32>
    %26 = vector.shape_cast %25 : vector<1x8xf32> to vector<1x8x1xf32>
    %27 = arith.truncf %24 : vector<1x8x8xf32> to vector<1x8x8xbf16>
    %28 = arith.truncf %11 : vector<1x8x32xf32> to vector<1x8x32xbf16>
    "tpu.trace_start"() <{level = 10 : i32, message = "bqk,bkd->bqd"}> : () -> ()
    %cst_12 = arith.constant dense<0.000000e+00> : vector<1x8x32xf32>
    %29 = tpu.matmul %27, %28, %cst_12 {dimension_numbers = #tpu.dot_dimension_numbers<[2], [1], [1], [2], [0, 0, 0, 1, 1, 2], [0], [0]>} : vector<1x8x8xbf16>, vector<1x8x32xbf16>, vector<1x8x32xf32> -> vector<1x8x32xf32>
    "tpu.trace_stop"() : () -> ()
    %30 = tpu.reciprocal %26 {approx = true} : vector<1x8x1xf32> -> vector<1x8x1xf32>
    %31 = vector.broadcast %30 : vector<1x8x1xf32> to vector<1x8x32xf32>
    %32 = arith.mulf %29, %31 : vector<1x8x32xf32>
    %33 = vector.shape_cast %32 : vector<1x8x32xf32> to vector<8x32xf32>
    %34 = arith.truncf %33 : vector<8x32xf32> to vector<8x32xbf16>
    %c0_13 = arith.constant 0 : index
    %c0_14 = arith.constant 0 : index
    %35 = vector.load %arg4[%c0_13, %c0_14] : memref<32x32xbf16, #tpu.memory_space<vmem>>, vector<32x32xbf16>
    %cst_15 = arith.constant dense<0.000000e+00> : vector<8x32xf32>
    %36 = tpu.matmul %34, %35, %cst_15 {dimension_numbers = #tpu.dot_dimension_numbers<[1], [0], [0], [1], [0, 0, 1, 1], [], []>} : vector<8x32xbf16>, vector<32x32xbf16>, vector<8x32xf32> -> vector<8x32xf32>
    %37 = vector.shape_cast %36 : vector<8x32xf32> to vector<1x8x32xf32>
    %38 = arith.addf %0, %37 : vector<1x8x32xf32>
    %39 = vector.shape_cast %38 : vector<1x8x32xf32> to vector<8x32xf32>
    %40 = arith.truncf %39 : vector<8x32xf32> to vector<8x32xbf16>
    %c0_16 = arith.constant 0 : index
    %c0_17 = arith.constant 0 : index
    %41 = vector.load %arg5[%c0_16, %c0_17] : memref<32x128xbf16, #tpu.memory_space<vmem>>, vector<32x128xbf16>
    %cst_18 = arith.constant dense<0.000000e+00> : vector<8x128xf32>
    %42 = tpu.matmul %40, %41, %cst_18 {dimension_numbers = #tpu.dot_dimension_numbers<[1], [0], [0], [1], [0, 0, 1, 1], [], []>} : vector<8x32xbf16>, vector<32x128xbf16>, vector<8x128xf32> -> vector<8x128xf32>
    %cst_19 = arith.constant 0.000000e+00 : f32
    %43 = vector.broadcast %cst_19 : f32 to vector<8x128xf32>
    %44 = arith.maximumf %42, %43 : vector<8x128xf32>
    %45 = arith.truncf %44 : vector<8x128xf32> to vector<8x128xbf16>
    %c0_20 = arith.constant 0 : index
    %c0_21 = arith.constant 0 : index
    %46 = vector.load %arg6[%c0_20, %c0_21] : memref<128x32xbf16, #tpu.memory_space<vmem>>, vector<128x32xbf16>
    %cst_22 = arith.constant dense<0.000000e+00> : vector<8x32xf32>
    %47 = tpu.matmul %45, %46, %cst_22 {dimension_numbers = #tpu.dot_dimension_numbers<[1], [0], [0], [1], [0, 0, 1, 1], [], []>} : vector<8x128xbf16>, vector<128x32xbf16>, vector<8x32xf32> -> vector<8x32xf32>
    %48 = vector.shape_cast %47 : vector<8x32xf32> to vector<1x8x32xf32>
    %49 = arith.addf %38, %48 : vector<1x8x32xf32>
    %50 = vector.shape_cast %49 : vector<1x8x32xf32> to vector<8x32xf32>
    %51 = arith.truncf %50 : vector<8x32xf32> to vector<8x32xbf16>
    %c0_23 = arith.constant 0 : index
    %c0_24 = arith.constant 0 : index
    %52 = vector.load %arg7[%c0_23, %c0_24] : memref<32x32xbf16, #tpu.memory_space<vmem>>, vector<32x32xbf16>
    %cst_25 = arith.constant dense<0.000000e+00> : vector<8x32xf32>
    %53 = tpu.matmul %51, %52, %cst_25 {dimension_numbers = #tpu.dot_dimension_numbers<[1], [0], [0], [1], [0, 0, 1, 1], [], []>} : vector<8x32xbf16>, vector<32x32xbf16>, vector<8x32xf32> -> vector<8x32xf32>
    %54 = vector.shape_cast %53 : vector<8x32xf32> to vector<1x8x32xf32>
    %c0_26 = arith.constant 0 : index
    %c0_27 = arith.constant 0 : index
    %55 = vector.load %arg8[%c0_26, %c0_27] : memref<32x32xbf16, #tpu.memory_space<vmem>>, vector<32x32xbf16>
    %cst_28 = arith.constant dense<0.000000e+00> : vector<8x32xf32>
    %56 = tpu.matmul %51, %55, %cst_28 {dimension_numbers = #tpu.dot_dimension_numbers<[1], [0], [0], [1], [0, 0, 1, 1], [], []>} : vector<8x32xbf16>, vector<32x32xbf16>, vector<8x32xf32> -> vector<8x32xf32>
    %57 = vector.shape_cast %56 : vector<8x32xf32> to vector<1x8x32xf32>
    %58 = arith.truncf %49 : vector<1x8x32xf32> to vector<1x8x32xbf16>
    %59 = arith.truncf %54 : vector<1x8x32xf32> to vector<1x8x32xbf16>
    "tpu.trace_start"() <{level = 10 : i32, message = "bqd,bkd->bqk"}> : () -> ()
    %cst_29 = arith.constant dense<0.000000e+00> : vector<1x8x8xf32>
    %60 = tpu.matmul %58, %59, %cst_29 {dimension_numbers = #tpu.dot_dimension_numbers<[2], [2], [1], [1], [0, 0, 0, 1, 1, 1], [0], [0]>} : vector<1x8x32xbf16>, vector<1x8x32xbf16>, vector<1x8x8xf32> -> vector<1x8x8xf32>
    "tpu.trace_stop"() : () -> ()
    %cst_30 = arith.constant 0.176776692 : f32
    %61 = vector.broadcast %cst_30 : f32 to vector<1x8x8xf32>
    %62 = arith.mulf %60, %61 : vector<1x8x8xf32>
    %cst_31 = arith.constant -1.000000e+30 : f32
    %63 = vector.shape_cast %3 : vector<8x8xi1> to vector<1x8x8xi1>
    %64 = vector.broadcast %cst_31 : f32 to vector<1x8x8xf32>
    %65 = arith.select %63, %62, %64 : vector<1x8x8xi1>, vector<1x8x8xf32>
    %cst_32 = arith.constant dense<0xFF800000> : vector<1x8xf32>
    %66 = vector.multi_reduction <maximumf>, %65, %cst_32 [2] : vector<1x8x8xf32> to vector<1x8xf32>
    %67 = vector.shape_cast %66 : vector<1x8xf32> to vector<1x8x1xf32>
    %68 = vector.broadcast %67 : vector<1x8x1xf32> to vector<1x8x8xf32>
    %69 = arith.subf %65, %68 : vector<1x8x8xf32>
    %70 = math.exp %69 : vector<1x8x8xf32>
    %cst_33 = arith.constant dense<0.000000e+00> : vector<1x8xf32>
    %71 = vector.multi_reduction <add>, %70, %cst_33 [2] : vector<1x8x8xf32> to vector<1x8xf32>
    %72 = vector.shape_cast %71 : vector<1x8xf32> to vector<1x8x1xf32>
    %73 = arith.truncf %70 : vector<1x8x8xf32> to vector<1x8x8xbf16>
    %74 = arith.truncf %57 : vector<1x8x32xf32> to vector<1x8x32xbf16>
    "tpu.trace_start"() <{level = 10 : i32, message = "bqk,bkd->bqd"}> : () -> ()
    %cst_34 = arith.constant dense<0.000000e+00> : vector<1x8x32xf32>
    %75 = tpu.matmul %73, %74, %cst_34 {dimension_numbers = #tpu.dot_dimension_numbers<[2], [1], [1], [2], [0, 0, 0, 1, 1, 2], [0], [0]>} : vector<1x8x8xbf16>, vector<1x8x32xbf16>, vector<1x8x32xf32> -> vector<1x8x32xf32>
    "tpu.trace_stop"() : () -> ()
    %76 = tpu.reciprocal %72 {approx = true} : vector<1x8x1xf32> -> vector<1x8x1xf32>
    %77 = vector.broadcast %76 : vector<1x8x1xf32> to vector<1x8x32xf32>
    %78 = arith.mulf %75, %77 : vector<1x8x32xf32>
    %79 = vector.shape_cast %78 : vector<1x8x32xf32> to vector<8x32xf32>
    %80 = arith.truncf %79 : vector<8x32xf32> to vector<8x32xbf16>
    %c0_35 = arith.constant 0 : index
    %c0_36 = arith.constant 0 : index
    %81 = vector.load %arg9[%c0_35, %c0_36] : memref<32x32xbf16, #tpu.memory_space<vmem>>, vector<32x32xbf16>
    %cst_37 = arith.constant dense<0.000000e+00> : vector<8x32xf32>
    %82 = tpu.matmul %80, %81, %cst_37 {dimension_numbers = #tpu.dot_dimension_numbers<[1], [0], [0], [1], [0, 0, 1, 1], [], []>} : vector<8x32xbf16>, vector<32x32xbf16>, vector<8x32xf32> -> vector<8x32xf32>
    %83 = vector.shape_cast %82 : vector<8x32xf32> to vector<1x8x32xf32>
    %84 = arith.addf %49, %83 : vector<1x8x32xf32>
    %85 = vector.shape_cast %84 : vector<1x8x32xf32> to vector<8x32xf32>
    %86 = arith.truncf %85 : vector<8x32xf32> to vector<8x32xbf16>
    %c0_38 = arith.constant 0 : index
    %c0_39 = arith.constant 0 : index
    %87 = vector.load %arg10[%c0_38, %c0_39] : memref<32x128xbf16, #tpu.memory_space<vmem>>, vector<32x128xbf16>
    %cst_40 = arith.constant dense<0.000000e+00> : vector<8x128xf32>
    %88 = tpu.matmul %86, %87, %cst_40 {dimension_numbers = #tpu.dot_dimension_numbers<[1], [0], [0], [1], [0, 0, 1, 1], [], []>} : vector<8x32xbf16>, vector<32x128xbf16>, vector<8x128xf32> -> vector<8x128xf32>
    %cst_41 = arith.constant 0.000000e+00 : f32
    %89 = vector.broadcast %cst_41 : f32 to vector<8x128xf32>
    %90 = arith.maximumf %88, %89 : vector<8x128xf32>
    %91 = arith.truncf %90 : vector<8x128xf32> to vector<8x128xbf16>
    %c0_42 = arith.constant 0 : index
    %c0_43 = arith.constant 0 : index
    %92 = vector.load %arg11[%c0_42, %c0_43] : memref<128x32xbf16, #tpu.memory_space<vmem>>, vector<128x32xbf16>
    %cst_44 = arith.constant dense<0.000000e+00> : vector<8x32xf32>
    %93 = tpu.matmul %91, %92, %cst_44 {dimension_numbers = #tpu.dot_dimension_numbers<[1], [0], [0], [1], [0, 0, 1, 1], [], []>} : vector<8x128xbf16>, vector<128x32xbf16>, vector<8x32xf32> -> vector<8x32xf32>
    %94 = vector.shape_cast %93 : vector<8x32xf32> to vector<1x8x32xf32>
    %95 = arith.addf %84, %94 : vector<1x8x32xf32>
    %96 = vector.extract_strided_slice %95 {offsets = [0, 7, 0], sizes = [1, 1, 32], strides = [1, 1, 1]} : vector<1x8x32xf32> to vector<1x1x32xf32>
    %97 = vector.shape_cast %96 : vector<1x1x32xf32> to vector<1x32xf32>
    %98 = vector.shape_cast %97 : vector<1x32xf32> to vector<1x1x32xf32>
    %c0_45 = arith.constant 0 : index
    %c0_46 = arith.constant 0 : index
    %c0_47 = arith.constant 0 : index
    %99 = vector.load %arg12[%c0_45, %c0_46, %c0_47] : memref<1x1x32xf32, #tpu.memory_space<vmem>>, vector<1x1x32xf32>
    tpu.vector_store %arg12[%c0_45, %c0_46, %c0_47], %98 {strides = array<i32>} : memref<1x1x32xf32, #tpu.memory_space<vmem>>, vector<1x1x32xf32>,
    return
  }
  func.func @transform_0(%arg0: i32) -> (i32, i32, i32) {
    %c0_i32 = arith.constant 0 : i32
    %c0_i32_0 = arith.constant 0 : i32
    %c0_i32_1 = arith.constant 0 : i32
    return %arg0, %c0_i32, %c0_i32_0 : i32, i32, i32
  }
  func.func @transform_1(%arg0: i32) -> (i32, i32) {
    %c0_i32 = arith.constant 0 : i32
    %c0_i32_0 = arith.constant 0 : i32
    %c0_i32_1 = arith.constant 0 : i32
    return %c0_i32, %c0_i32_0 : i32, i32
  }
  func.func @transform_2(%arg0: i32) -> (i32, i32) {
    %c0_i32 = arith.constant 0 : i32
    %c0_i32_0 = arith.constant 0 : i32
    %c0_i32_1 = arith.constant 0 : i32
    return %c0_i32, %c0_i32_0 : i32, i32
  }
  func.func @transform_3(%arg0: i32) -> (i32, i32) {
    %c0_i32 = arith.constant 0 : i32
    %c0_i32_0 = arith.constant 0 : i32
    %c0_i32_1 = arith.constant 0 : i32
    return %c0_i32, %c0_i32_0 : i32, i32
  }
  func.func @transform_4(%arg0: i32) -> (i32, i32) {
    %c0_i32 = arith.constant 0 : i32
    %c0_i32_0 = arith.constant 0 : i32
    %c0_i32_1 = arith.constant 0 : i32
    return %c0_i32, %c0_i32_0 : i32, i32
  }
  func.func @transform_5(%arg0: i32) -> (i32, i32) {
    %c0_i32 = arith.constant 0 : i32
    %c0_i32_0 = arith.constant 0 : i32
    %c0_i32_1 = arith.constant 0 : i32
    return %c0_i32, %c0_i32_0 : i32, i32
  }
  func.func @transform_6(%arg0: i32) -> (i32, i32) {
    %c0_i32 = arith.constant 0 : i32
    %c0_i32_0 = arith.constant 0 : i32
    %c0_i32_1 = arith.constant 0 : i32
    return %c0_i32, %c0_i32_0 : i32, i32
  }
  func.func @transform_7(%arg0: i32) -> (i32, i32) {
    %c0_i32 = arith.constant 0 : i32
    %c0_i32_0 = arith.constant 0 : i32
    %c0_i32_1 = arith.constant 0 : i32
    return %c0_i32, %c0_i32_0 : i32, i32
  }
  func.func @transform_8(%arg0: i32) -> (i32, i32) {
    %c0_i32 = arith.constant 0 : i32
    %c0_i32_0 = arith.constant 0 : i32
    %c0_i32_1 = arith.constant 0 : i32
    return %c0_i32, %c0_i32_0 : i32, i32
  }
  func.func @transform_9(%arg0: i32) -> (i32, i32) {
    %c0_i32 = arith.constant 0 : i32
    %c0_i32_0 = arith.constant 0 : i32
    %c0_i32_1 = arith.constant 0 : i32
    return %c0_i32, %c0_i32_0 : i32, i32
  }
  func.func @transform_10(%arg0: i32) -> (i32, i32) {
    %c0_i32 = arith.constant 0 : i32
    %c0_i32_0 = arith.constant 0 : i32
    %c0_i32_1 = arith.constant 0 : i32
    return %c0_i32, %c0_i32_0 : i32, i32
  }
  func.func @transform_11(%arg0: i32) -> (i32, i32, i32) {
    %c0_i32 = arith.constant 0 : i32
    %c0_i32_0 = arith.constant 0 : i32
    %c0_i32_1 = arith.constant 0 : i32
    return %arg0, %c0_i32, %c0_i32_0 : i32, i32, i32
  }
}

</mosaic_0001>

<llo_original>
// kernel: tpu_custom_call.1
$region0: #{tpu_custom_call.1}
  #allocation0 [shape = 'u32[]', space=smem, size = 0x4, offset = 0x4, fixed_abs, tag = 'smem constant byte address 0x4 - core index']
  #allocation1 [shape = 'u32[144,128]{1,0:T(1,128)}', space=vmem, size = 0x12000, scoped, tag = 'internal scratch']
  %s0 = inlined_call_operand.hbm [shape: f32[2,8,32], index: 0, kind: input, shape index: {}]
  %s1 = inlined_call_operand.hbm [shape: bf16[32,32], index: 1, kind: input, shape index: {}]
  %s2 = inlined_call_operand.hbm [shape: bf16[32,32], index: 2, kind: input, shape index: {}]
  %s3 = inlined_call_operand.hbm [shape: bf16[32,32], index: 3, kind: input, shape index: {}]
  %s4 = inlined_call_operand.hbm [shape: bf16[32,128], index: 4, kind: input, shape index: {}]
  %s5 = inlined_call_operand.hbm [shape: bf16[128,32], index: 5, kind: input, shape index: {}]
  %s6 = inlined_call_operand.hbm [shape: bf16[32,32], index: 6, kind: input, shape index: {}]
  %s7 = inlined_call_operand.hbm [shape: bf16[32,32], index: 7, kind: input, shape index: {}]
  %s8 = inlined_call_operand.hbm [shape: bf16[32,32], index: 8, kind: input, shape index: {}]
  %s9 = inlined_call_operand.hbm [shape: bf16[32,128], index: 9, kind: input, shape index: {}]
  %s10 = inlined_call_operand.hbm [shape: bf16[128,32], index: 10, kind: input, shape index: {}]
  %s11 = inlined_call_operand.hbm [shape: f32[2,1,32], index: 11, kind: output, shape index: {}]
  %s12 = sld [smem:[#allocation0]]
  $region121: #{tpu_custom_call.1} parent=0
    _
  %s14 = ssub.s32 1, %s12
  %s15 = scalar_select 0, %s14, %s12
  $region1: #{tpu_custom_call.1} parent=0
    #allocation2 [shape = 'u8[8192]{0}', space=vmem, size = 0x2000, scoped, tag = 'input window, operand 0']
    #allocation3 [shape = 's32[2]{0}', space=sflag, size = 0x8, scoped, tag = 'scoped memory for tpu_custom_call.1']
    #allocation4 [shape = 's32[2]{0}', space=sflag, size = 0x8, scoped, tag = 'scoped memory for tpu_custom_call.1']
    #allocation5 [shape = 'u8[8192]{0}', space=vmem, size = 0x2000, scoped, tag = 'input window, operand 1, single buffered']
    #allocation6 [shape = 's32[1]{0}', space=sflag, size = 0x4, scoped, tag = 'scoped memory for tpu_custom_call.1']
    #allocation7 [shape = 'u8[8192]{0}', space=vmem, size = 0x2000, scoped, tag = 'input window, operand 2, single buffered']
    #allocation8 [shape = 'u8[8192]{0}', space=vmem, size = 0x2000, scoped, tag = 'input window, operand 3, single buffered']
    #allocation9 [shape = 's32[1]{0}', space=sflag, size = 0x4, scoped, tag = 'scoped memory for tpu_custom_call.1']
    #allocation10 [shape = 'u8[8192]{0}', space=vmem, size = 0x2000, scoped, tag = 'input window, operand 4, single buffered']
    #allocation11 [shape = 'u8[32768]{0}', space=vmem, size = 0x8000, scoped, tag = 'input window, operand 5, single buffered']
    #allocation12 [shape = 's32[1]{0}', space=sflag, size = 0x4, scoped, tag = 'scoped memory for tpu_custom_call.1']
    #allocation13 [shape = 'u8[8192]{0}', space=vmem, size = 0x2000, scoped, tag = 'input window, operand 6, single buffered']
    #allocation14 [shape = 'u8[8192]{0}', space=vmem, size = 0x2000, scoped, tag = 'input window, operand 7, single buffered']
    #allocation15 [shape = 's32[1]{0}', space=sflag, size = 0x4, scoped, tag = 'scoped memory for tpu_custom_call.1']
    #allocation16 [shape = 'u8[8192]{0}', space=vmem, size = 0x2000, scoped, tag = 'input window, operand 8, single buffered']
    #allocation17 [shape = 'u8[8192]{0}', space=vmem, size = 0x2000, scoped, tag = 'input window, operand 9, single buffered']
    #allocation18 [shape = 's32[1]{0}', space=sflag, size = 0x4, scoped, tag = 'scoped memory for tpu_custom_call.1']
    #allocation19 [shape = 'u8[32768]{0}', space=vmem, size = 0x8000, scoped, tag = 'input window, operand 10, single buffered']
    #allocation20 [shape = 'u8[1024]{0}', space=vmem, size = 0x400, scoped, tag = 'output window, operand 0']
    %16 = vsyncpa [#allocation3], 0
    %s17 = scalar_lea.sflag [#allocation3], 1
    %18 = vsyncpa %s17, 0
    %19 = vsyncpa [#allocation6], 0
    %20 = vsyncpa [#allocation9], 0
    %21 = vsyncpa [#allocation12], 0
    %22 = vsyncpa [#allocation15], 0
    %23 = vsyncpa [#allocation18], 0
    %24 = vsyncpa [#allocation4], 0
    %s25 = scalar_lea.sflag [#allocation4], 1
    %26 = vsyncpa %s25, 0
    loop: start=0, step=1, limit=4
    $region2: #{tpu_custom_call.1} parent=1 // loop_pre_header
      _
    $region3: #{tpu_custom_call.1} parent=1 // loop_header
      %s28 = sphi 0, %s32
      %p29 = scmp.ge.s32.totalorder %s28, 4
      %s38 = sphi 0, %s40
      %s41 = sphi 0, %s38
      %s42 = sphi 0, %s41
      %s58 = sphi 0, %s42
      %s62 = sphi 0, %s62
      %s64 = sphi 0, %s62
      %s65 = sphi 0, %s64
      %s79 = sphi 0, %s65
      %s83 = sphi 0, %s83
      %s85 = sphi 0, %s83
      %s86 = sphi 0, %s85
      %s100 = sphi 0, %s86
      %s104 = sphi 0, %s104
      %s106 = sphi 0, %s104
      %s107 = sphi 0, %s106
      %s121 = sphi 0, %s107
      %s125 = sphi 0, %s125
      %s127 = sphi 0, %s125
      %s128 = sphi 0, %s127
      %s142 = sphi 0, %s128
      %s146 = sphi 0, %s146
      %s148 = sphi 0, %s146
      %s149 = sphi 0, %s148
      %s163 = sphi 0, %s149
      %s167 = sphi 0, %s167
      %s169 = sphi 0, %s167
      %s170 = sphi 0, %s169
      %s184 = sphi 0, %s170
      %s188 = sphi 0, %s188
      %s190 = sphi 0, %s188
      %s191 = sphi 0, %s190
      %s205 = sphi 0, %s191
      %s209 = sphi 0, %s209
      %s211 = sphi 0, %s209
      %s212 = sphi 0, %s211
      %s226 = sphi 0, %s212
      %s230 = sphi 0, %s230
      %s232 = sphi 0, %s230
      %s233 = sphi 0, %s232
      %s247 = sphi 0, %s233
      %s251 = sphi 0, %s251
      %s253 = sphi 0, %s251
      %s254 = sphi 0, %s253
      %s268 = sphi 0, %s254
      %s274 = sphi 0, %s276
      %s277 = sphi 0, %s274
      %s278 = sphi 0, %s277
      %s294 = sphi 0, %s278
    $region4: #{tpu_custom_call.1} parent=1 // loop_header_branch
      %31 = sbr.rel (%p29) target = $region8
    $region5: #{tpu_custom_call.1} parent=1 // loop_body
      %s33 = ssub.s32 %s28, 1
      %s34 = ssub.s32 %s28, 2
      %s35 = sadd.s32 %s28, 1
      %s36 = ssub.s32 %s28, %s35
      %p37 = scmp.eq.s32.totalorder %s36, 0
      %s39 = sadd.s32 %s38, 1
      %s40 = scalar_select %p37, %s38, %s39
      %p43 = pneg %p37
      %p44 = scmp.eq.s32.totalorder %s28, 1
      %p45 = por %p43, %p44
      %p46 = scmp.ne.s32.totalorder %s38, %s41
      %p47 = scmp.eq.s32.totalorder %s28, 0
      %p48 = por %p46, %p47
      %p49 = scmp.ne.s32.totalorder %s38, %s41
      %p50 = scmp.eq.s32.totalorder %s33, 1
      %p51 = por %p49, %p50
      %p52 = scmp.ne.s32.totalorder %s41, %s42
      %p53 = scmp.eq.s32.totalorder %s33, 0
      %p54 = por %p52, %p53
      %p55 = scmp.ne.s32.totalorder %s41, %s42
      %p56 = scmp.eq.s32.totalorder %s34, 1
      %p57 = por %p55, %p56
      %p59 = scmp.ne.s32.totalorder %s42, %s58
      %p60 = scmp.eq.s32.totalorder %s34, 0
      %p61 = por %p59, %p60
      %s63 = sadd.s32 %s62, 1
      %p66 = scmp.eq.s32.totalorder %s28, 1
      %p67 = scmp.ne.s32.totalorder %s62, %s64
      %p68 = scmp.eq.s32.totalorder %s28, 0
      %p69 = por %p67, %p68
      %p70 = scmp.ne.s32.totalorder %s62, %s64
      %p71 = scmp.eq.s32.totalorder %s33, 1
      %p72 = por %p70, %p71
      %p73 = scmp.ne.s32.totalorder %s64, %s65
      %p74 = scmp.eq.s32.totalorder %s33, 0
      %p75 = por %p73, %p74
      %p76 = scmp.ne.s32.totalorder %s64, %s65
      %p77 = scmp.eq.s32.totalorder %s34, 1
      %p78 = por %p76, %p77
      %p80 = scmp.ne.s32.totalorder %s65, %s79
      %p81 = scmp.eq.s32.totalorder %s34, 0
      %p82 = por %p80, %p81
      %s84 = sadd.s32 %s83, 1
      %p87 = scmp.eq.s32.totalorder %s28, 1
      %p88 = scmp.ne.s32.totalorder %s83, %s85
      %p89 = scmp.eq.s32.totalorder %s28, 0
      %p90 = por %p88, %p89
      %p91 = scmp.ne.s32.totalorder %s83, %s85
      %p92 = scmp.eq.s32.totalorder %s33, 1
      %p93 = por %p91, %p92
      %p94 = scmp.ne.s32.totalorder %s85, %s86
      %p95 = scmp.eq.s32.totalorder %s33, 0
      %p96 = por %p94, %p95
      %p97 = scmp.ne.s32.totalorder %s85, %s86
      %p98 = scmp.eq.s32.totalorder %s34, 1
      %p99 = por %p97, %p98
      %p101 = scmp.ne.s32.totalorder %s86, %s100
      %p102 = scmp.eq.s32.totalorder %s34, 0
      %p103 = por %p101, %p102
      %s105 = sadd.s32 %s104, 1
      %p108 = scmp.eq.s32.totalorder %s28, 1
      %p109 = scmp.ne.s32.totalorder %s104, %s106
      %p110 = scmp.eq.s32.totalorder %s28, 0
      %p111 = por %p109, %p110
      %p112 = scmp.ne.s32.totalorder %s104, %s106
      %p113 = scmp.eq.s32.totalorder %s33, 1
      %p114 = por %p112, %p113
      %p115 = scmp.ne.s32.totalorder %s106, %s107
      %p116 = scmp.eq.s32.totalorder %s33, 0
      %p117 = por %p115, %p116
      %p118 = scmp.ne.s32.totalorder %s106, %s107
      %p119 = scmp.eq.s32.totalorder %s34, 1
      %p120 = por %p118, %p119
      %p122 = scmp.ne.s32.totalorder %s107, %s121
      %p123 = scmp.eq.s32.totalorder %s34, 0
      %p124 = por %p122, %p123
      %s126 = sadd.s32 %s125, 1
      %p129 = scmp.eq.s32.totalorder %s28, 1
      %p130 = scmp.ne.s32.totalorder %s125, %s127
      %p131 = scmp.eq.s32.totalorder %s28, 0
      %p132 = por %p130, %p131
      %p133 = scmp.ne.s32.totalorder %s125, %s127
      %p134 = scmp.eq.s32.totalorder %s33, 1
      %p135 = por %p133, %p134
      %p136 = scmp.ne.s32.totalorder %s127, %s128
      %p137 = scmp.eq.s32.totalorder %s33, 0
      %p138 = por %p136, %p137
      %p139 = scmp.ne.s32.totalorder %s127, %s128
      %p140 = scmp.eq.s32.totalorder %s34, 1
      %p141 = por %p139, %p140
      %p143 = scmp.ne.s32.totalorder %s128, %s142
      %p144 = scmp.eq.s32.totalorder %s34, 0
      %p145 = por %p143, %p144
      %s147 = sadd.s32 %s146, 1
      %p150 = scmp.eq.s32.totalorder %s28, 1
      %p151 = scmp.ne.s32.totalorder %s146, %s148
      %p152 = scmp.eq.s32.totalorder %s28, 0
      %p153 = por %p151, %p152
      %p154 = scmp.ne.s32.totalorder %s146, %s148
      %p155 = scmp.eq.s32.totalorder %s33, 1
      %p156 = por %p154, %p155
      %p157 = scmp.ne.s32.totalorder %s148, %s149
      %p158 = scmp.eq.s32.totalorder %s33, 0
      %p159 = por %p157, %p158
      %p160 = scmp.ne.s32.totalorder %s148, %s149
      %p161 = scmp.eq.s32.totalorder %s34, 1
      %p162 = por %p160, %p161
      %p164 = scmp.ne.s32.totalorder %s149, %s163
      %p165 = scmp.eq.s32.totalorder %s34, 0
      %p166 = por %p164, %p165
      %s168 = sadd.s32 %s167, 1
      %p171 = scmp.eq.s32.totalorder %s28, 1
      %p172 = scmp.ne.s32.totalorder %s167, %s169
      %p173 = scmp.eq.s32.totalorder %s28, 0
      %p174 = por %p172, %p173
      %p175 = scmp.ne.s32.totalorder %s167, %s169
      %p176 = scmp.eq.s32.totalorder %s33, 1
      %p177 = por %p175, %p176
      %p178 = scmp.ne.s32.totalorder %s169, %s170
      %p179 = scmp.eq.s32.totalorder %s33, 0
      %p180 = por %p178, %p179
      %p181 = scmp.ne.s32.totalorder %s169, %s170
      %p182 = scmp.eq.s32.totalorder %s34, 1
      %p183 = por %p181, %p182
      %p185 = scmp.ne.s32.totalorder %s170, %s184
      %p186 = scmp.eq.s32.totalorder %s34, 0
      %p187 = por %p185, %p186
      %s189 = sadd.s32 %s188, 1
      %p192 = scmp.eq.s32.totalorder %s28, 1
      %p193 = scmp.ne.s32.totalorder %s188, %s190
      %p194 = scmp.eq.s32.totalorder %s28, 0
      %p195 = por %p193, %p194
      %p196 = scmp.ne.s32.totalorder %s188, %s190
      %p197 = scmp.eq.s32.totalorder %s33, 1
      %p198 = por %p196, %p197
      %p199 = scmp.ne.s32.totalorder %s190, %s191
      %p200 = scmp.eq.s32.totalorder %s33, 0
      %p201 = por %p199, %p200
      %p202 = scmp.ne.s32.totalorder %s190, %s191
      %p203 = scmp.eq.s32.totalorder %s34, 1
      %p204 = por %p202, %p203
      %p206 = scmp.ne.s32.totalorder %s191, %s205
      %p207 = scmp.eq.s32.totalorder %s34, 0
      %p208 = por %p206, %p207
      %s210 = sadd.s32 %s209, 1
      %p213 = scmp.eq.s32.totalorder %s28, 1
      %p214 = scmp.ne.s32.totalorder %s209, %s211
      %p215 = scmp.eq.s32.totalorder %s28, 0
      %p216 = por %p214, %p215
      %p217 = scmp.ne.s32.totalorder %s209, %s211
      %p218 = scmp.eq.s32.totalorder %s33, 1
      %p219 = por %p217, %p218
      %p220 = scmp.ne.s32.totalorder %s211, %s212
      %p221 = scmp.eq.s32.totalorder %s33, 0
      %p222 = por %p220, %p221
      %p223 = scmp.ne.s32.totalorder %s211, %s212
      %p224 = scmp.eq.s32.totalorder %s34, 1
      %p225 = por %p223, %p224
      %p227 = scmp.ne.s32.totalorder %s212, %s226
      %p228 = scmp.eq.s32.totalorder %s34, 0
      %p229 = por %p227, %p228
      %s231 = sadd.s32 %s230, 1
      %p234 = scmp.eq.s32.totalorder %s28, 1
      %p235 = scmp.ne.s32.totalorder %s230, %s232
      %p236 = scmp.eq.s32.totalorder %s28, 0
      %p237 = por %p235, %p236
      %p238 = scmp.ne.s32.totalorder %s230, %s232
      %p239 = scmp.eq.s32.totalorder %s33, 1
      %p240 = por %p238, %p239
      %p241 = scmp.ne.s32.totalorder %s232, %s233
      %p242 = scmp.eq.s32.totalorder %s33, 0
      %p243 = por %p241, %p242
      %p244 = scmp.ne.s32.totalorder %s232, %s233
      %p245 = scmp.eq.s32.totalorder %s34, 1
      %p246 = por %p244, %p245
      %p248 = scmp.ne.s32.totalorder %s233, %s247
      %p249 = scmp.eq.s32.totalorder %s34, 0
      %p250 = por %p248, %p249
      %s252 = sadd.s32 %s251, 1
      %p255 = scmp.eq.s32.totalorder %s28, 1
      %p256 = scmp.ne.s32.totalorder %s251, %s253
      %p257 = scmp.eq.s32.totalorder %s28, 0
      %p258 = por %p256, %p257
      %p259 = scmp.ne.s32.totalorder %s251, %s253
      %p260 = scmp.eq.s32.totalorder %s33, 1
      %p261 = por %p259, %p260
      %p262 = scmp.ne.s32.totalorder %s253, %s254
      %p263 = scmp.eq.s32.totalorder %s33, 0
      %p264 = por %p262, %p263
      %p265 = scmp.ne.s32.totalorder %s253, %s254
      %p266 = scmp.eq.s32.totalorder %s34, 1
      %p267 = por %p265, %p266
      %p269 = scmp.ne.s32.totalorder %s254, %s268
      %p270 = scmp.eq.s32.totalorder %s34, 0
      %p271 = por %p269, %p270
      %s272 = ssub.s32 %s28, %s35
      %p273 = scmp.eq.s32.totalorder %s272, 0
      %s275 = sadd.s32 %s274, 1
      %s276 = scalar_select %p273, %s274, %s275
      %p279 = pneg %p273
      %p280 = scmp.eq.s32.totalorder %s28, 1
      %p281 = por %p279, %p280
      %p282 = scmp.ne.s32.totalorder %s274, %s277
      %p283 = scmp.eq.s32.totalorder %s28, 0
      %p284 = por %p282, %p283
      %p285 = scmp.ne.s32.totalorder %s274, %s277
      %p286 = scmp.eq.s32.totalorder %s33, 1
      %p287 = por %p285, %p286
      %p288 = scmp.ne.s32.totalorder %s277, %s278
      %p289 = scmp.eq.s32.totalorder %s33, 0
      %p290 = por %p288, %p289
      %p291 = scmp.ne.s32.totalorder %s277, %s278
      %p292 = scmp.eq.s32.totalorder %s34, 1
      %p293 = por %p291, %p292
      %p295 = scmp.ne.s32.totalorder %s278, %s294
      %p296 = scmp.eq.s32.totalorder %s34, 0
      %p297 = por %p295, %p296
      %p298 = scmp.le.s32.totalorder 1, %s28
      %p299 = scmp.lt.s32.totalorder %s28, 3
      %p300 = pnand %p298, %p299
      %p301 = pneg %p300
      // Predicated region
      $region9: #{tpu_custom_call.1} parent=5 // pred_check
        _
      $region10: #{tpu_custom_call.1} parent=5 // pred_check_branch
        %303 = sbr.rel (%p300) target = $region12
      $region11: #{tpu_custom_call.1} parent=5 // pred_region
        %s304 = ssub.s32 %s28, 1
        // Predicated region
        $region13: #{tpu_custom_call.1} parent=11 // pred_check
          %p305 = pneg %p75
        $region14: #{tpu_custom_call.1} parent=11 // pred_check_branch
          %307 = sbr.rel (%p305) target = $region16
        $region15: #{tpu_custom_call.1} parent=11 // pred_region
          %s309 = ssub.s32 256, 256
          %310 = vsyncadd [#allocation6], %s309
          %s311 = sshll.u32 [#allocation5], 4
          %s312 = int_to_ptr.vmem [resolvable:$true] %s311
          %317 = dma.hbm_to_vmem [thread:$0]  %s1, 256, %s312, [#allocation6], 64, 64, 4
        $region16: #{tpu_custom_call.1} parent=11 // pred_fallthru
          _
        // Predicated region
        $region17: #{tpu_custom_call.1} parent=11 // pred_check
          %p318 = pneg %p96
        $region18: #{tpu_custom_call.1} parent=11 // pred_check_branch
          %320 = sbr.rel (%p318) target = $region20
        $region19: #{tpu_custom_call.1} parent=11 // pred_region
          %s322 = ssub.s32 256, 256
          %323 = vsyncadd [#allocation6], %s322
          %s324 = sshll.u32 [#allocation7], 4
          %s325 = int_to_ptr.vmem [resolvable:$true] %s324
          %330 = dma.hbm_to_vmem [thread:$0]  %s2, 256, %s325, [#allocation6], 64, 64, 4
        $region20: #{tpu_custom_call.1} parent=11 // pred_fallthru
          _
        // Predicated region
        $region21: #{tpu_custom_call.1} parent=11 // pred_check
          %p331 = pneg %p117
        $region22: #{tpu_custom_call.1} parent=11 // pred_check_branch
          %333 = sbr.rel (%p331) target = $region24
        $region23: #{tpu_custom_call.1} parent=11 // pred_region
          %s335 = ssub.s32 256, 256
          %336 = vsyncadd [#allocation9], %s335
          %s337 = sshll.u32 [#allocation8], 4
          %s338 = int_to_ptr.vmem [resolvable:$true] %s337
          %343 = dma.hbm_to_vmem [thread:$0]  %s3, 256, %s338, [#allocation9], 64, 64, 4
        $region24: #{tpu_custom_call.1} parent=11 // pred_fallthru
          _
        // Predicated region
        $region25: #{tpu_custom_call.1} parent=11 // pred_check
          %p344 = pneg %p138
        $region26: #{tpu_custom_call.1} parent=11 // pred_check_branch
          %346 = sbr.rel (%p344) target = $region28
        $region27: #{tpu_custom_call.1} parent=11 // pred_region
          %s348 = ssub.s32 256, 256
          %349 = vsyncadd [#allocation9], %s348
          %s350 = sshll.u32 [#allocation10], 4
          %s351 = int_to_ptr.vmem [resolvable:$true] %s350
          %356 = dma.hbm_to_vmem [thread:$0]  %s4, 256, %s351, [#allocation9], 64, 64, 4
        $region28: #{tpu_custom_call.1} parent=11 // pred_fallthru
          _
        // Predicated region
        $region29: #{tpu_custom_call.1} parent=11 // pred_check
          %p357 = pneg %p159
        $region30: #{tpu_custom_call.1} parent=11 // pred_check_branch
          %359 = sbr.rel (%p357) target = $region32
        $region31: #{tpu_custom_call.1} parent=11 // pred_region
          %s361 = ssub.s32 1024, 1024
          %362 = vsyncadd [#allocation12], %s361
          %s363 = sshll.u32 [#allocation11], 4
          %s364 = int_to_ptr.vmem [resolvable:$true] %s363
          %369 = dma.hbm_to_vmem [thread:$0]  %s5, 1024, %s364, [#allocation12], 64, 64, 4
        $region32: #{tpu_custom_call.1} parent=11 // pred_fallthru
          _
        // Predicated region
        $region33: #{tpu_custom_call.1} parent=11 // pred_check
          %p370 = pneg %p180
        $region34: #{tpu_custom_call.1} parent=11 // pred_check_branch
          %372 = sbr.rel (%p370) target = $region36
        $region35: #{tpu_custom_call.1} parent=11 // pred_region
          %s374 = ssub.s32 256, 256
          %375 = vsyncadd [#allocation12], %s374
          %s376 = sshll.u32 [#allocation13], 4
          %s377 = int_to_ptr.vmem [resolvable:$true] %s376
          %382 = dma.hbm_to_vmem [thread:$0]  %s6, 256, %s377, [#allocation12], 64, 64, 4
        $region36: #{tpu_custom_call.1} parent=11 // pred_fallthru
          _
        // Predicated region
        $region37: #{tpu_custom_call.1} parent=11 // pred_check
          %p383 = pneg %p201
        $region38: #{tpu_custom_call.1} parent=11 // pred_check_branch
          %385 = sbr.rel (%p383) target = $region40
        $region39: #{tpu_custom_call.1} parent=11 // pred_region
          %s387 = ssub.s32 256, 256
          %388 = vsyncadd [#allocation15], %s387
          %s389 = sshll.u32 [#allocation14], 4
          %s390 = int_to_ptr.vmem [resolvable:$true] %s389
          %395 = dma.hbm_to_vmem [thread:$0]  %s7, 256, %s390, [#allocation15], 64, 64, 4
        $region40: #{tpu_custom_call.1} parent=11 // pred_fallthru
          _
        // Predicated region
        $region41: #{tpu_custom_call.1} parent=11 // pred_check
          %p396 = pneg %p222
        $region42: #{tpu_custom_call.1} parent=11 // pred_check_branch
          %398 = sbr.rel (%p396) target = $region44
        $region43: #{tpu_custom_call.1} parent=11 // pred_region
          %s400 = ssub.s32 256, 256
          %401 = vsyncadd [#allocation15], %s400
          %s402 = sshll.u32 [#allocation16], 4
          %s403 = int_to_ptr.vmem [resolvable:$true] %s402
          %408 = dma.hbm_to_vmem [thread:$0]  %s8, 256, %s403, [#allocation15], 64, 64, 4
        $region44: #{tpu_custom_call.1} parent=11 // pred_fallthru
          _
        // Predicated region
        $region45: #{tpu_custom_call.1} parent=11 // pred_check
          %p409 = pneg %p243
        $region46: #{tpu_custom_call.1} parent=11 // pred_check_branch
          %411 = sbr.rel (%p409) target = $region48
        $region47: #{tpu_custom_call.1} parent=11 // pred_region
          %s413 = ssub.s32 256, 256
          %414 = vsyncadd [#allocation18], %s413
          %s415 = sshll.u32 [#allocation17], 4
          %s416 = int_to_ptr.vmem [resolvable:$true] %s415
          %421 = dma.hbm_to_vmem [thread:$0]  %s9, 256, %s416, [#allocation18], 64, 64, 4
        $region48: #{tpu_custom_call.1} parent=11 // pred_fallthru
          _
        // Predicated region
        $region49: #{tpu_custom_call.1} parent=11 // pred_check
          %p422 = pneg %p264
        $region50: #{tpu_custom_call.1} parent=11 // pred_check_branch
          %424 = sbr.rel (%p422) target = $region52
        $region51: #{tpu_custom_call.1} parent=11 // pred_region
          %s426 = ssub.s32 1024, 1024
          %427 = vsyncadd [#allocation18], %s426
          %s428 = sshll.u32 [#allocation19], 4
          %s429 = int_to_ptr.vmem [resolvable:$true] %s428
          %434 = dma.hbm_to_vmem [thread:$0]  %s10, 1024, %s429, [#allocation18], 64, 64, 4
        $region52: #{tpu_custom_call.1} parent=11 // pred_fallthru
          _
      $region12: #{tpu_custom_call.1} parent=5 // pred_fallthru
        _
      %p435 = scmp.lt.s32.totalorder %s28, 2
      // Predicated region
      $region53: #{tpu_custom_call.1} parent=5 // pred_check
        %p436 = pneg %p435
      $region54: #{tpu_custom_call.1} parent=5 // pred_check_branch
        %438 = sbr.rel (%p436) target = $region56
      $region55: #{tpu_custom_call.1} parent=5 // pred_region
        // Predicated region
        $region57: #{tpu_custom_call.1} parent=55 // pred_check
          %p439 = pneg %p48
        $region58: #{tpu_custom_call.1} parent=55 // pred_check_branch
          %441 = sbr.rel (%p439) target = $region60
        $region59: #{tpu_custom_call.1} parent=55 // pred_region
          %s442 = sand.u32 %s38, 1
          %s443 = scalar_lea.sflag [#allocation3], %s442
          %s444 = sand.u32 %s38, 1
          %s445 = smul.addr %s444, 8
          %s446 = scalar_lea.vmem [#allocation2], %s445
          %s448 = ssub.s32 128, 128
          %449 = vsyncadd %s443, %s448
          %s450 = smul.addr %s28, 128
          %s451 = scalar_lea.hbm %s0, %s450
          %s453 = sshll.u32 %s446, 4
          %s454 = int_to_ptr.vmem [resolvable:$true] %s453
          %456 = dma.hbm_to_vmem [thread:$0]  %s451, 128, %s454, %s443
        $region60: #{tpu_custom_call.1} parent=55 // pred_fallthru
          _
      $region56: #{tpu_custom_call.1} parent=5 // pred_fallthru
        _
      %p457 = scmp.le.s32.totalorder 1, %s28
      %p458 = scmp.lt.s32.totalorder %s28, 3
      %p459 = pnand %p457, %p458
      %p460 = pneg %p459
      // Predicated region
      $region61: #{tpu_custom_call.1} parent=5 // pred_check
        _
      $region62: #{tpu_custom_call.1} parent=5 // pred_check_branch
        %462 = sbr.rel (%p459) target = $region64
      $region63: #{tpu_custom_call.1} parent=5 // pred_region
        %s463 = ssub.s32 %s28, 1
        %s464 = sand.u32 %s41, 1
        %s465 = scalar_lea.sflag [#allocation3], %s464
        %s466 = sand.u32 %s41, 1
        %s467 = smul.addr %s466, 8
        %s468 = scalar_lea.vmem [#allocation2], %s467
        // Predicated region
        $region65: #{tpu_custom_call.1} parent=63 // pred_check
          %p469 = pneg %p54
        $region66: #{tpu_custom_call.1} parent=63 // pred_check_branch
          %471 = sbr.rel (%p469) target = $region68
        $region67: #{tpu_custom_call.1} parent=63 // pred_region
          %472 = dma.done %s465, 128
        $region68: #{tpu_custom_call.1} parent=63 // pred_fallthru
          _
        // Predicated region
        $region69: #{tpu_custom_call.1} parent=63 // pred_check
          %p473 = pneg %p75
        $region70: #{tpu_custom_call.1} parent=63 // pred_check_branch
          %475 = sbr.rel (%p473) target = $region72
        $region71: #{tpu_custom_call.1} parent=63 // pred_region
          %476 = dma.done [#allocation6], 256
        $region72: #{tpu_custom_call.1} parent=63 // pred_fallthru
          _
        // Predicated region
        $region73: #{tpu_custom_call.1} parent=63 // pred_check
          %p477 = pneg %p96
        $region74: #{tpu_custom_call.1} parent=63 // pred_check_branch
          %479 = sbr.rel (%p477) target = $region76
        $region75: #{tpu_custom_call.1} parent=63 // pred_region
          %480 = dma.done [#allocation6], 256
        $region76: #{tpu_custom_call.1} parent=63 // pred_fallthru
          _
        // Predicated region
        $region77: #{tpu_custom_call.1} parent=63 // pred_check
          %p481 = pneg %p117
        $region78: #{tpu_custom_call.1} parent=63 // pred_check_branch
          %483 = sbr.rel (%p481) target = $region80
        $region79: #{tpu_custom_call.1} parent=63 // pred_region
          %484 = dma.done [#allocation9], 256
        $region80: #{tpu_custom_call.1} parent=63 // pred_fallthru
          _
        // Predicated region
        $region81: #{tpu_custom_call.1} parent=63 // pred_check
          %p485 = pneg %p138
        $region82: #{tpu_custom_call.1} parent=63 // pred_check_branch
          %487 = sbr.rel (%p485) target = $region84
        $region83: #{tpu_custom_call.1} parent=63 // pred_region
          %488 = dma.done [#allocation9], 256
        $region84: #{tpu_custom_call.1} parent=63 // pred_fallthru
          _
        // Predicated region
        $region85: #{tpu_custom_call.1} parent=63 // pred_check
          %p489 = pneg %p159
        $region86: #{tpu_custom_call.1} parent=63 // pred_check_branch
          %491 = sbr.rel (%p489) target = $region88
        $region87: #{tpu_custom_call.1} parent=63 // pred_region
          %492 = dma.done [#allocation12], 1024
        $region88: #{tpu_custom_call.1} parent=63 // pred_fallthru
          _
        // Predicated region
        $region89: #{tpu_custom_call.1} parent=63 // pred_check
          %p493 = pneg %p180
        $region90: #{tpu_custom_call.1} parent=63 // pred_check_branch
          %495 = sbr.rel (%p493) target = $region92
        $region91: #{tpu_custom_call.1} parent=63 // pred_region
          %496 = dma.done [#allocation12], 256
        $region92: #{tpu_custom_call.1} parent=63 // pred_fallthru
          _
        // Predicated region
        $region93: #{tpu_custom_call.1} parent=63 // pred_check
          %p497 = pneg %p201
        $region94: #{tpu_custom_call.1} parent=63 // pred_check_branch
          %499 = sbr.rel (%p497) target = $region96
        $region95: #{tpu_custom_call.1} parent=63 // pred_region
          %500 = dma.done [#allocation15], 256
        $region96: #{tpu_custom_call.1} parent=63 // pred_fallthru
          _
        // Predicated region
        $region97: #{tpu_custom_call.1} parent=63 // pred_check
          %p501 = pneg %p222
        $region98: #{tpu_custom_call.1} parent=63 // pred_check_branch
          %503 = sbr.rel (%p501) target = $region100
        $region99: #{tpu_custom_call.1} parent=63 // pred_region
          %504 = dma.done [#allocation15], 256
        $region100: #{tpu_custom_call.1} parent=63 // pred_fallthru
          _
        // Predicated region
        $region101: #{tpu_custom_call.1} parent=63 // pred_check
          %p505 = pneg %p243
        $region102: #{tpu_custom_call.1} parent=63 // pred_check_branch
          %507 = sbr.rel (%p505) target = $region104
        $region103: #{tpu_custom_call.1} parent=63 // pred_region
          %508 = dma.done [#allocation18], 256
        $region104: #{tpu_custom_call.1} parent=63 // pred_fallthru
          _
        // Predicated region
        $region105: #{tpu_custom_call.1} parent=63 // pred_check
          %p509 = pneg %p264
        $region106: #{tpu_custom_call.1} parent=63 // pred_check_branch
          %511 = sbr.rel (%p509) target = $region108
        $region107: #{tpu_custom_call.1} parent=63 // pred_region
          %512 = dma.done [#allocation18], 1024
        $region108: #{tpu_custom_call.1} parent=63 // pred_fallthru
          _
        %s513 = sand.u32 %s41, 1
        %s514 = scalar_lea.sflag [#allocation3], %s513
        %s515 = sand.u32 %s41, 1
        %s516 = smul.addr %s515, 8
        %s517 = scalar_lea.vmem [#allocation2], %s516
        %p518 = pneg %p54
        %p519 = pneg %p51
        %p520 = pneg %p75
        %p521 = pneg %p72
        %p522 = pneg %p96
        %p523 = pneg %p93
        %p524 = pneg %p117
        %p525 = pneg %p114
        %p526 = pneg %p138
        %p527 = pneg %p135
        %p528 = pneg %p159
        %p529 = pneg %p156
        %p530 = pneg %p180
        %p531 = pneg %p177
        %p532 = pneg %p201
        %p533 = pneg %p198
        %p534 = pneg %p222
        %p535 = pneg %p219
        %p536 = pneg %p243
        %p537 = pneg %p240
        %p538 = pneg %p264
        %p539 = pneg %p261
        %p540 = pneg %p290
        %p541 = pneg %p287
        %s542 = sand.u32 %s277, 1
        %s543 = scalar_lea.sflag [#allocation4], %s542
        %s544 = sand.u32 %s277, 1
        %s545 = scalar_lea.vmem [#allocation20], %s544
        %v547 = vld [vmem:[%s468] sm:$0xff]
        %v548 = vlaneseq
        %v549 = vshrl.u32 %v548, 7
        %v550 = vlaneseq
        %v551 = vand.u32 %v550, 127
        %vm552 = vcmp.le.s32.totalorder %v551, %v549
        %v553 = vpack.c.bf16 %v547, %v547
        %v554 = vld [vmem:[#allocation5] sm:$0xf]
        %v555 = vld [vmem:[#allocation5 + $0x4] sm:$0xf]
        %v556 = vld [vmem:[#allocation5 + $0x8] sm:$0xf]
        %v557 = vld [vmem:[#allocation5 + $0xc] sm:$0xf]
        %v562 = vunpack.c.l.b16 %v554
        %v563 = vunpack.c.l.b16 %v555
        %v564 = vunpack.c.l.b16 %v556
        %v565 = vunpack.c.l.b16 %v557
        %v566 = vpack.c.b16 %v563, %v562
        %v567 = vpack.c.b16 %v565, %v564
        %vm570 = vcmask 261120
        %v572 = vsel %vm570, %v553, 0
        %574 = vmatprep.subr.bf16.mxu0 0
        %575 = vmatpush1.bf16.msra.mxu0 %v566
        %576 = vmatprep.subr.bf16.mxu0 0
        %577 = vmatpush1.bf16.msra.mxu0 %v567
        %578 = vmatprep.subr.bf16.mxu0 0
        %579 = vmatpush1.bf16.msra.mxu0 0
        %580 = vmatprep.subr.bf16.mxu0 0
        %581 = vmatpush1.bf16.msra.mxu0 0
        %582 = vmatprep.subr.bf16.mxu0 0
        %583 = vmatpush1.bf16.msra.mxu0 0
        %584 = vmatprep.subr.bf16.mxu0 0
        %585 = vmatpush1.bf16.msra.mxu0 0
        %586 = vmatprep.subr.bf16.mxu0 0
        %587 = vmatpush1.bf16.msra.mxu0 0
        %588 = vmatprep.subr.bf16.mxu0 0
        %589 = vmatpush1.bf16.msra.mxu0 0
        %590 = vmatprep.subr.bf16.mxu0 0
        %591 = vmatpush1.bf16.msra.mxu0 0
        %592 = vmatprep.subr.bf16.mxu0 0
        %593 = vmatpush1.bf16.msra.mxu0 0
        %594 = vmatprep.subr.bf16.mxu0 0
        %595 = vmatpush1.bf16.msra.mxu0 0
        %596 = vmatprep.subr.bf16.mxu0 0
        %597 = vmatpush1.bf16.msra.mxu0 0
        %598 = vmatprep.subr.bf16.mxu0 0
        %599 = vmatpush1.bf16.msra.mxu0 0
        %600 = vmatprep.subr.bf16.mxu0 0
        %601 = vmatpush1.bf16.msra.mxu0 0
        %602 = vmatprep.subr.bf16.mxu0 0
        %603 = vmatpush1.bf16.msra.mxu0 0
        %604 = vmatprep.subr.bf16.mxu0 0
        %605 = vmatpush1.bf16.msra.mxu0 0
        %606 = vmatprep.mubr.bf16.mxu0 0
        %607 = vmatmul.mubr.bf16.gmra.mrb[0].mxu0 %v572
        %v608 = vpop.f32.mrb[0].mxu0
        %v609 = vadd.f32 0.0, %v608
        %v610 = vpop.f32.mrb[0].mxu0
        %v611 = vpop.f32.mrb[0].mxu0
        %v612 = vpop.f32.mrb[0].mxu0
        %613 = vdwg.mxu0
        %v614 = vld [vmem:[#allocation7] sm:$0xf]
        %v615 = vld [vmem:[#allocation7 + $0x4] sm:$0xf]
        %v616 = vld [vmem:[#allocation7 + $0x8] sm:$0xf]
        %v617 = vld [vmem:[#allocation7 + $0xc] sm:$0xf]
        %v622 = vunpack.c.l.b16 %v614
        %v623 = vunpack.c.l.b16 %v615
        %v624 = vunpack.c.l.b16 %v616
        %v625 = vunpack.c.l.b16 %v617
        %v626 = vpack.c.b16 %v623, %v622
        %v627 = vpack.c.b16 %v625, %v624
        %630 = vmatprep.subr.bf16.mxu0 0
        %631 = vmatpush1.bf16.msra.mxu0 %v626
        %632 = vmatprep.subr.bf16.mxu0 0
        %633 = vmatpush1.bf16.msra.mxu0 %v627
        %634 = vmatprep.subr.bf16.mxu0 0
        %635 = vmatpush1.bf16.msra.mxu0 0
        %636 = vmatprep.subr.bf16.mxu0 0
        %637 = vmatpush1.bf16.msra.mxu0 0
        %638 = vmatprep.subr.bf16.mxu0 0
        %639 = vmatpush1.bf16.msra.mxu0 0
        %640 = vmatprep.subr.bf16.mxu0 0
        %641 = vmatpush1.bf16.msra.mxu0 0
        %642 = vmatprep.subr.bf16.mxu0 0
        %643 = vmatpush1.bf16.msra.mxu0 0
        %644 = vmatprep.subr.bf16.mxu0 0
        %645 = vmatpush1.bf16.msra.mxu0 0
        %646 = vmatprep.subr.bf16.mxu0 0
        %647 = vmatpush1.bf16.msra.mxu0 0
        %648 = vmatprep.subr.bf16.mxu0 0
        %649 = vmatpush1.bf16.msra.mxu0 0
        %650 = vmatprep.subr.bf16.mxu0 0
        %651 = vmatpush1.bf16.msra.mxu0 0
        %652 = vmatprep.subr.bf16.mxu0 0
        %653 = vmatpush1.bf16.msra.mxu0 0
        %654 = vmatprep.subr.bf16.mxu0 0
        %655 = vmatpush1.bf16.msra.mxu0 0
        %656 = vmatprep.subr.bf16.mxu0 0
        %657 = vmatpush1.bf16.msra.mxu0 0
        %658 = vmatprep.subr.bf16.mxu0 0
        %659 = vmatpush1.bf16.msra.mxu0 0
        %660 = vmatprep.subr.bf16.mxu0 0
        %661 = vmatpush1.bf16.msra.mxu0 0
        %662 = vmatprep.mubr.bf16.mxu0 0
        %663 = vmatmul.mubr.bf16.gmra.mrb[0].mxu0 %v572
        %v664 = vpop.f32.mrb[0].mxu0
        %v665 = vadd.f32 0.0, %v664
        %v666 = vpop.f32.mrb[0].mxu0
        %v667 = vpop.f32.mrb[0].mxu0
        %v668 = vpop.f32.mrb[0].mxu0
        %669 = vdwg.mxu0
        %v670 = vpack.c.bf16 %v609, %v609
        %v672 = vsel %vm570, %v670, 0
        %674 = vmatprep.subr.bf16.mxu0 0
        %675 = vmatpush1.bf16.xpose.msra.mxu0 %v672
        %676 = vmatprep.subr.bf16.mxu0 0
        %677 = vmatpush1.bf16.xpose.msra.mxu0 0
        %678 = vmatprep.subr.bf16.mxu0 0
        %679 = vmatpush1.bf16.xpose.msra.mxu0 0
        %680 = vmatprep.subr.bf16.mxu0 0
        %681 = vmatpush1.bf16.xpose.msra.mxu0 0
        %682 = vmatprep.subr.bf16.mxu0 0
        %683 = vmatpush1.bf16.xpose.msra.mxu0 0
        %684 = vmatprep.subr.bf16.mxu0 0
        %685 = vmatpush1.bf16.xpose.msra.mxu0 0
        %686 = vmatprep.subr.bf16.mxu0 0
        %687 = vmatpush1.bf16.xpose.msra.mxu0 0
        %688 = vmatprep.subr.bf16.mxu0 0
        %689 = vmatpush1.bf16.xpose.msra.mxu0 0
        %690 = vmatprep.subr.bf16.mxu0 0
        %691 = vmatpush1.bf16.xpose.msra.mxu0 0
        %692 = vmatprep.subr.bf16.mxu0 0
        %693 = vmatpush1.bf16.xpose.msra.mxu0 0
        %694 = vmatprep.subr.bf16.mxu0 0
        %695 = vmatpush1.bf16.xpose.msra.mxu0 0
        %696 = vmatprep.subr.bf16.mxu0 0
        %697 = vmatpush1.bf16.xpose.msra.mxu0 0
        %698 = vmatprep.subr.bf16.mxu0 0
        %699 = vmatpush1.bf16.xpose.msra.mxu0 0
        %700 = vmatprep.subr.bf16.mxu0 0
        %701 = vmatpush1.bf16.xpose.msra.mxu0 0
        %702 = vmatprep.subr.bf16.mxu0 0
        %703 = vmatpush1.bf16.xpose.msra.mxu0 0
        %704 = vmatprep.subr.bf16.mxu0 0
        %705 = vmatpush1.bf16.xpose.msra.mxu0 0
        %706 = vmatprep.mubr.bf16.mxu0 0
        %707 = vmatmul.mubr.bf16.gmra.mrb[0].mxu0 %v572
        %v708 = vpop.f32.mrb[0].mxu0
        %v709 = vadd.f32 0.0, %v708
        %v710 = vpop.f32.mrb[0].mxu0
        %v711 = vpop.f32.mrb[0].mxu0
        %v712 = vpop.f32.mrb[0].mxu0
        %713 = vdwg.mxu0
        %v714 = vmul.f32 %v709, 0.17677669
        %v715 = vsel %vm552, %v714, -1e+30
        %vm716 = vcmask 64512
        %v717 = vsel %vm716, %v715, -inf
        %718 = vmax.xlane.f32.xlu0 %v717
        %v719 = vpop.xlane.xlu0 %718
        %v720 = vsub.f32 %v715, %v719
        %v721 = vmul.f32 %v720, 1.442695
        %v722 = vpow.pop %v721
        %v723 = vsel %vm716, %v722, 0.0
        %724 = vadd.xlane.f32.xlu0 %v723
        %v725 = vpop.xlane.xlu0 %724
        %v726 = vpack.c.bf16 %v722, %v722
        %v727 = vpack.c.bf16 %v665, %v665
        %v729 = vsel %vm716, %v726, 0
        %vm731 = vcmask 1043456
        %v733 = vsel %vm731, %v727, 0
        %735 = vmatprep.subr.bf16.mxu0 0
        %736 = vmatpush1.bf16.msra.mxu0 %v733
        %737 = vmatprep.subr.bf16.mxu0 0
        %738 = vmatpush1.bf16.msra.mxu0 0
        %739 = vmatprep.subr.bf16.mxu0 0
        %740 = vmatpush1.bf16.msra.mxu0 0
        %741 = vmatprep.subr.bf16.mxu0 0
        %742 = vmatpush1.bf16.msra.mxu0 0
        %743 = vmatprep.subr.bf16.mxu0 0
        %744 = vmatpush1.bf16.msra.mxu0 0
        %745 = vmatprep.subr.bf16.mxu0 0
        %746 = vmatpush1.bf16.msra.mxu0 0
        %747 = vmatprep.subr.bf16.mxu0 0
        %748 = vmatpush1.bf16.msra.mxu0 0
        %749 = vmatprep.subr.bf16.mxu0 0
        %750 = vmatpush1.bf16.msra.mxu0 0
        %751 = vmatprep.subr.bf16.mxu0 0
        %752 = vmatpush1.bf16.msra.mxu0 0
        %753 = vmatprep.subr.bf16.mxu0 0
        %754 = vmatpush1.bf16.msra.mxu0 0
        %755 = vmatprep.subr.bf16.mxu0 0
        %756 = vmatpush1.bf16.msra.mxu0 0
        %757 = vmatprep.subr.bf16.mxu0 0
        %758 = vmatpush1.bf16.msra.mxu0 0
        %759 = vmatprep.subr.bf16.mxu0 0
        %760 = vmatpush1.bf16.msra.mxu0 0
        %761 = vmatprep.subr.bf16.mxu0 0
        %762 = vmatpush1.bf16.msra.mxu0 0
        %763 = vmatprep.subr.bf16.mxu0 0
        %764 = vmatpush1.bf16.msra.mxu0 0
        %765 = vmatprep.subr.bf16.mxu0 0
        %766 = vmatpush1.bf16.msra.mxu0 0
        %767 = vmatprep.mubr.bf16.mxu0 0
        %768 = vmatmul.mubr.bf16.gmra.mrb[0].mxu0 %v729
        %v769 = vpop.f32.mrb[0].mxu0
        %v770 = vadd.f32 0.0, %v769
        %v771 = vpop.f32.mrb[0].mxu0
        %v772 = vpop.f32.mrb[0].mxu0
        %v773 = vpop.f32.mrb[0].mxu0
        %774 = vdwg.mxu0
        %v775 = vrcp.pop %v725
        %v776 = vmul.f32 %v770, %v775
        %v777 = vpack.c.bf16 %v776, %v776
        %v778 = vld [vmem:[#allocation8] sm:$0xf]
        %v779 = vld [vmem:[#allocation8 + $0x4] sm:$0xf]
        %v780 = vld [vmem:[#allocation8 + $0x8] sm:$0xf]
        %v781 = vld [vmem:[#allocation8 + $0xc] sm:$0xf]
        %v786 = vunpack.c.l.b16 %v778
        %v787 = vunpack.c.l.b16 %v779
        %v788 = vunpack.c.l.b16 %v780
        %v789 = vunpack.c.l.b16 %v781
        %v790 = vpack.c.b16 %v787, %v786
        %v791 = vpack.c.b16 %v789, %v788
        %v795 = vsel %vm570, %v777, 0
        %797 = vmatprep.subr.bf16.mxu0 0
        %798 = vmatpush1.bf16.msra.mxu0 %v790
        %799 = vmatprep.subr.bf16.mxu0 0
        %800 = vmatpush1.bf16.msra.mxu0 %v791
        %801 = vmatprep.subr.bf16.mxu0 0
        %802 = vmatpush1.bf16.msra.mxu0 0
        %803 = vmatprep.subr.bf16.mxu0 0
        %804 = vmatpush1.bf16.msra.mxu0 0
        %805 = vmatprep.subr.bf16.mxu0 0
        %806 = vmatpush1.bf16.msra.mxu0 0
        %807 = vmatprep.subr.bf16.mxu0 0
        %808 = vmatpush1.bf16.msra.mxu0 0
        %809 = vmatprep.subr.bf16.mxu0 0
        %810 = vmatpush1.bf16.msra.mxu0 0
        %811 = vmatprep.subr.bf16.mxu0 0
        %812 = vmatpush1.bf16.msra.mxu0 0
        %813 = vmatprep.subr.bf16.mxu0 0
        %814 = vmatpush1.bf16.msra.mxu0 0
        %815 = vmatprep.subr.bf16.mxu0 0
        %816 = vmatpush1.bf16.msra.mxu0 0
        %817 = vmatprep.subr.bf16.mxu0 0
        %818 = vmatpush1.bf16.msra.mxu0 0
        %819 = vmatprep.subr.bf16.mxu0 0
        %820 = vmatpush1.bf16.msra.mxu0 0
        %821 = vmatprep.subr.bf16.mxu0 0
        %822 = vmatpush1.bf16.msra.mxu0 0
        %823 = vmatprep.subr.bf16.mxu0 0
        %824 = vmatpush1.bf16.msra.mxu0 0
        %825 = vmatprep.subr.bf16.mxu0 0
        %826 = vmatpush1.bf16.msra.mxu0 0
        %827 = vmatprep.subr.bf16.mxu0 0
        %828 = vmatpush1.bf16.msra.mxu0 0
        %829 = vmatprep.mubr.bf16.mxu0 0
        %830 = vmatmul.mubr.bf16.gmra.mrb[0].mxu0 %v795
        %v831 = vpop.f32.mrb[0].mxu0
        %v832 = vadd.f32 0.0, %v831
        %v833 = vpop.f32.mrb[0].mxu0
        %v834 = vpop.f32.mrb[0].mxu0
        %v835 = vpop.f32.mrb[0].mxu0
        %836 = vdwg.mxu0
        %v837 = vadd.f32 %v547, %v832
        %v838 = vpack.c.bf16 %v837, %v837
        %v839 = vld [vmem:[#allocation10] sm:$0xf]
        %v840 = vld [vmem:[#allocation10 + $0x4] sm:$0xf]
        %v841 = vld [vmem:[#allocation10 + $0x8] sm:$0xf]
        %v842 = vld [vmem:[#allocation10 + $0xc] sm:$0xf]
        %v847 = vunpack.c.l.b16 %v839
        %v848 = vunpack.c.l.b16 %v840
        %v849 = vunpack.c.l.b16 %v841
        %v850 = vunpack.c.l.b16 %v842
        %v851 = vpack.c.b16 %v848, %v847
        %v852 = vpack.c.b16 %v850, %v849
        %v856 = vsel %vm570, %v838, 0
        %858 = vmatprep.subr.bf16.mxu0 0
        %859 = vmatpush1.bf16.msra.mxu0 %v851
        %860 = vmatprep.subr.bf16.mxu0 0
        %861 = vmatpush1.bf16.msra.mxu0 %v852
        %862 = vmatprep.subr.bf16.mxu0 0
        %863 = vmatpush1.bf16.msra.mxu0 0
        %864 = vmatprep.subr.bf16.mxu0 0
        %865 = vmatpush1.bf16.msra.mxu0 0
        %866 = vmatprep.subr.bf16.mxu0 0
        %867 = vmatpush1.bf16.msra.mxu0 0
        %868 = vmatprep.subr.bf16.mxu0 0
        %869 = vmatpush1.bf16.msra.mxu0 0
        %870 = vmatprep.subr.bf16.mxu0 0
        %871 = vmatpush1.bf16.msra.mxu0 0
        %872 = vmatprep.subr.bf16.mxu0 0
        %873 = vmatpush1.bf16.msra.mxu0 0
        %874 = vmatprep.subr.bf16.mxu0 0
        %875 = vmatpush1.bf16.msra.mxu0 0
        %876 = vmatprep.subr.bf16.mxu0 0
        %877 = vmatpush1.bf16.msra.mxu0 0
        %878 = vmatprep.subr.bf16.mxu0 0
        %879 = vmatpush1.bf16.msra.mxu0 0
        %880 = vmatprep.subr.bf16.mxu0 0
        %881 = vmatpush1.bf16.msra.mxu0 0
        %882 = vmatprep.subr.bf16.mxu0 0
        %883 = vmatpush1.bf16.msra.mxu0 0
        %884 = vmatprep.subr.bf16.mxu0 0
        %885 = vmatpush1.bf16.msra.mxu0 0
        %886 = vmatprep.subr.bf16.mxu0 0
        %887 = vmatpush1.bf16.msra.mxu0 0
        %888 = vmatprep.subr.bf16.mxu0 0
        %889 = vmatpush1.bf16.msra.mxu0 0
        %890 = vmatprep.mubr.bf16.mxu0 0
        %891 = vmatmul.mubr.bf16.gmra.mrb[0].mxu0 %v856
        %v892 = vpop.f32.mrb[0].mxu0
        %v893 = vadd.f32 0.0, %v892
        %v894 = vpop.f32.mrb[0].mxu0
        %v895 = vpop.f32.mrb[0].mxu0
        %v896 = vpop.f32.mrb[0].mxu0
        %897 = vdwg.mxu0
        %v898 = vmax.f32 %v893, 0.0
        %v899 = vpack.c.bf16 %v898, %v898
        %v900 = vld [vmem:[#allocation11] sm:$0xf]
        %v901 = vld [vmem:[#allocation11 + $0x4] sm:$0xf]
        %v902 = vld [vmem:[#allocation11 + $0x8] sm:$0xf]
        %v903 = vld [vmem:[#allocation11 + $0xc] sm:$0xf]
        %v904 = vld [vmem:[#allocation11 + $0x10] sm:$0xf]
        %v905 = vld [vmem:[#allocation11 + $0x14] sm:$0xf]
        %v906 = vld [vmem:[#allocation11 + $0x18] sm:$0xf]
        %v907 = vld [vmem:[#allocation11 + $0x1c] sm:$0xf]
        %v908 = vld [vmem:[#allocation11 + $0x20] sm:$0xf]
        %v909 = vld [vmem:[#allocation11 + $0x24] sm:$0xf]
        %v910 = vld [vmem:[#allocation11 + $0x28] sm:$0xf]
        %v911 = vld [vmem:[#allocation11 + $0x2c] sm:$0xf]
        %v912 = vld [vmem:[#allocation11 + $0x30] sm:$0xf]
        %v913 = vld [vmem:[#allocation11 + $0x34] sm:$0xf]
        %v914 = vld [vmem:[#allocation11 + $0x38] sm:$0xf]
        %v915 = vld [vmem:[#allocation11 + $0x3c] sm:$0xf]
        %v932 = vunpack.c.l.b16 %v900
        %v933 = vunpack.c.l.b16 %v901
        %v934 = vunpack.c.l.b16 %v902
        %v935 = vunpack.c.l.b16 %v903
        %v936 = vunpack.c.l.b16 %v904
        %v937 = vunpack.c.l.b16 %v905
        %v938 = vunpack.c.l.b16 %v906
        %v939 = vunpack.c.l.b16 %v907
        %v940 = vunpack.c.l.b16 %v908
        %v941 = vunpack.c.l.b16 %v909
        %v942 = vunpack.c.l.b16 %v910
        %v943 = vunpack.c.l.b16 %v911
        %v944 = vunpack.c.l.b16 %v912
        %v945 = vunpack.c.l.b16 %v913
        %v946 = vunpack.c.l.b16 %v914
        %v947 = vunpack.c.l.b16 %v915
        %v948 = vpack.c.b16 %v933, %v932
        %v949 = vpack.c.b16 %v935, %v934
        %v950 = vpack.c.b16 %v937, %v936
        %v951 = vpack.c.b16 %v939, %v938
        %v952 = vpack.c.b16 %v941, %v940
        %v953 = vpack.c.b16 %v943, %v942
        %v954 = vpack.c.b16 %v945, %v944
        %v955 = vpack.c.b16 %v947, %v946
        %964 = vmatprep.subr.bf16.mxu0 0
        %965 = vmatpush1.bf16.msra.mxu0 %v948
        %966 = vmatprep.subr.bf16.mxu0 0
        %967 = vmatpush1.bf16.msra.mxu0 %v949
        %968 = vmatprep.subr.bf16.mxu0 0
        %969 = vmatpush1.bf16.msra.mxu0 %v950
        %970 = vmatprep.subr.bf16.mxu0 0
        %971 = vmatpush1.bf16.msra.mxu0 %v951
        %972 = vmatprep.subr.bf16.mxu0 0
        %973 = vmatpush1.bf16.msra.mxu0 %v952
        %974 = vmatprep.subr.bf16.mxu0 0
        %975 = vmatpush1.bf16.msra.mxu0 %v953
        %976 = vmatprep.subr.bf16.mxu0 0
        %977 = vmatpush1.bf16.msra.mxu0 %v954
        %978 = vmatprep.subr.bf16.mxu0 0
        %979 = vmatpush1.bf16.msra.mxu0 %v955
        %980 = vmatprep.subr.bf16.mxu0 0
        %981 = vmatpush1.bf16.msra.mxu0 0
        %982 = vmatprep.subr.bf16.mxu0 0
        %983 = vmatpush1.bf16.msra.mxu0 0
        %984 = vmatprep.subr.bf16.mxu0 0
        %985 = vmatpush1.bf16.msra.mxu0 0
        %986 = vmatprep.subr.bf16.mxu0 0
        %987 = vmatpush1.bf16.msra.mxu0 0
        %988 = vmatprep.subr.bf16.mxu0 0
        %989 = vmatpush1.bf16.msra.mxu0 0
        %990 = vmatprep.subr.bf16.mxu0 0
        %991 = vmatpush1.bf16.msra.mxu0 0
        %992 = vmatprep.subr.bf16.mxu0 0
        %993 = vmatpush1.bf16.msra.mxu0 0
        %994 = vmatprep.subr.bf16.mxu0 0
        %995 = vmatpush1.bf16.msra.mxu0 0
        %996 = vmatprep.mubr.bf16.mxu0 0
        %997 = vmatmul.mubr.bf16.gmra.mrb[0].mxu0 %v899
        %v998 = vpop.f32.mrb[0].mxu0
        %v999 = vadd.f32 0.0, %v998
        %v1000 = vpop.f32.mrb[0].mxu0
        %v1001 = vpop.f32.mrb[0].mxu0
        %v1002 = vpop.f32.mrb[0].mxu0
        %1003 = vdwg.mxu0
        %v1004 = vadd.f32 %v837, %v999
        %v1005 = vpack.c.bf16 %v1004, %v1004
        %v1006 = vld [vmem:[#allocation13] sm:$0xf]
        %v1007 = vld [vmem:[#allocation13 + $0x4] sm:$0xf]
        %v1008 = vld [vmem:[#allocation13 + $0x8] sm:$0xf]
        %v1009 = vld [vmem:[#allocation13 + $0xc] sm:$0xf]
        %v1014 = vunpack.c.l.b16 %v1006
        %v1015 = vunpack.c.l.b16 %v1007
        %v1016 = vunpack.c.l.b16 %v1008
        %v1017 = vunpack.c.l.b16 %v1009
        %v1018 = vpack.c.b16 %v1015, %v1014
        %v1019 = vpack.c.b16 %v1017, %v1016
        %v1023 = vsel %vm570, %v1005, 0
        %1025 = vmatprep.subr.bf16.mxu0 0
        %1026 = vmatpush1.bf16.msra.mxu0 %v1018
        %1027 = vmatprep.subr.bf16.mxu0 0
        %1028 = vmatpush1.bf16.msra.mxu0 %v1019
        %1029 = vmatprep.subr.bf16.mxu0 0
        %1030 = vmatpush1.bf16.msra.mxu0 0
        %1031 = vmatprep.subr.bf16.mxu0 0
        %1032 = vmatpush1.bf16.msra.mxu0 0
        %1033 = vmatprep.subr.bf16.mxu0 0
        %1034 = vmatpush1.bf16.msra.mxu0 0
        %1035 = vmatprep.subr.bf16.mxu0 0
        %1036 = vmatpush1.bf16.msra.mxu0 0
        %1037 = vmatprep.subr.bf16.mxu0 0
        %1038 = vmatpush1.bf16.msra.mxu0 0
        %1039 = vmatprep.subr.bf16.mxu0 0
        %1040 = vmatpush1.bf16.msra.mxu0 0
        %1041 = vmatprep.subr.bf16.mxu0 0
        %1042 = vmatpush1.bf16.msra.mxu0 0
        %1043 = vmatprep.subr.bf16.mxu0 0
        %1044 = vmatpush1.bf16.msra.mxu0 0
        %1045 = vmatprep.subr.bf16.mxu0 0
        %1046 = vmatpush1.bf16.msra.mxu0 0
        %1047 = vmatprep.subr.bf16.mxu0 0
        %1048 = vmatpush1.bf16.msra.mxu0 0
        %1049 = vmatprep.subr.bf16.mxu0 0
        %1050 = vmatpush1.bf16.msra.mxu0 0
        %1051 = vmatprep.subr.bf16.mxu0 0
        %1052 = vmatpush1.bf16.msra.mxu0 0
        %1053 = vmatprep.subr.bf16.mxu0 0
        %1054 = vmatpush1.bf16.msra.mxu0 0
        %1055 = vmatprep.subr.bf16.mxu0 0
        %1056 = vmatpush1.bf16.msra.mxu0 0
        %1057 = vmatprep.mubr.bf16.mxu0 0
        %1058 = vmatmul.mubr.bf16.gmra.mrb[0].mxu0 %v1023
        %v1059 = vpop.f32.mrb[0].mxu0
        %v1060 = vadd.f32 0.0, %v1059
        %v1061 = vpop.f32.mrb[0].mxu0
        %v1062 = vpop.f32.mrb[0].mxu0
        %v1063 = vpop.f32.mrb[0].mxu0
        %1064 = vdwg.mxu0
        %v1065 = vld [vmem:[#allocation14] sm:$0xf]
        %v1066 = vld [vmem:[#allocation14 + $0x4] sm:$0xf]
        %v1067 = vld [vmem:[#allocation14 + $0x8] sm:$0xf]
        %v1068 = vld [vmem:[#allocation14 + $0xc] sm:$0xf]
        %v1073 = vunpack.c.l.b16 %v1065
        %v1074 = vunpack.c.l.b16 %v1066
        %v1075 = vunpack.c.l.b16 %v1067
        %v1076 = vunpack.c.l.b16 %v1068
        %v1077 = vpack.c.b16 %v1074, %v1073
        %v1078 = vpack.c.b16 %v1076, %v1075
        %1081 = vmatprep.subr.bf16.mxu0 0
        %1082 = vmatpush1.bf16.msra.mxu0 %v1077
        %1083 = vmatprep.subr.bf16.mxu0 0
        %1084 = vmatpush1.bf16.msra.mxu0 %v1078
        %1085 = vmatprep.subr.bf16.mxu0 0
        %1086 = vmatpush1.bf16.msra.mxu0 0
        %1087 = vmatprep.subr.bf16.mxu0 0
        %1088 = vmatpush1.bf16.msra.mxu0 0
        %1089 = vmatprep.subr.bf16.mxu0 0
        %1090 = vmatpush1.bf16.msra.mxu0 0
        %1091 = vmatprep.subr.bf16.mxu0 0
        %1092 = vmatpush1.bf16.msra.mxu0 0
        %1093 = vmatprep.subr.bf16.mxu0 0
        %1094 = vmatpush1.bf16.msra.mxu0 0
        %1095 = vmatprep.subr.bf16.mxu0 0
        %1096 = vmatpush1.bf16.msra.mxu0 0
        %1097 = vmatprep.subr.bf16.mxu0 0
        %1098 = vmatpush1.bf16.msra.mxu0 0
        %1099 = vmatprep.subr.bf16.mxu0 0
        %1100 = vmatpush1.bf16.msra.mxu0 0
        %1101 = vmatprep.subr.bf16.mxu0 0
        %1102 = vmatpush1.bf16.msra.mxu0 0
        %1103 = vmatprep.subr.bf16.mxu0 0
        %1104 = vmatpush1.bf16.msra.mxu0 0
        %1105 = vmatprep.subr.bf16.mxu0 0
        %1106 = vmatpush1.bf16.msra.mxu0 0
        %1107 = vmatprep.subr.bf16.mxu0 0
        %1108 = vmatpush1.bf16.msra.mxu0 0
        %1109 = vmatprep.subr.bf16.mxu0 0
        %1110 = vmatpush1.bf16.msra.mxu0 0
        %1111 = vmatprep.subr.bf16.mxu0 0
        %1112 = vmatpush1.bf16.msra.mxu0 0
        %1113 = vmatprep.mubr.bf16.mxu0 0
        %1114 = vmatmul.mubr.bf16.gmra.mrb[0].mxu0 %v1023
        %v1115 = vpop.f32.mrb[0].mxu0
        %v1116 = vadd.f32 0.0, %v1115
        %v1117 = vpop.f32.mrb[0].mxu0
        %v1118 = vpop.f32.mrb[0].mxu0
        %v1119 = vpop.f32.mrb[0].mxu0
        %1120 = vdwg.mxu0
        %v1121 = vpack.c.bf16 %v1060, %v1060
        %v1123 = vsel %vm570, %v1121, 0
        %1125 = vmatprep.subr.bf16.mxu0 0
        %1126 = vmatpush1.bf16.xpose.msra.mxu0 %v1123
        %1127 = vmatprep.subr.bf16.mxu0 0
        %1128 = vmatpush1.bf16.xpose.msra.mxu0 0
        %1129 = vmatprep.subr.bf16.mxu0 0
        %1130 = vmatpush1.bf16.xpose.msra.mxu0 0
        %1131 = vmatprep.subr.bf16.mxu0 0
        %1132 = vmatpush1.bf16.xpose.msra.mxu0 0
        %1133 = vmatprep.subr.bf16.mxu0 0
        %1134 = vmatpush1.bf16.xpose.msra.mxu0 0
        %1135 = vmatprep.subr.bf16.mxu0 0
        %1136 = vmatpush1.bf16.xpose.msra.mxu0 0
        %1137 = vmatprep.subr.bf16.mxu0 0
        %1138 = vmatpush1.bf16.xpose.msra.mxu0 0
        %1139 = vmatprep.subr.bf16.mxu0 0
        %1140 = vmatpush1.bf16.xpose.msra.mxu0 0
        %1141 = vmatprep.subr.bf16.mxu0 0
        %1142 = vmatpush1.bf16.xpose.msra.mxu0 0
        %1143 = vmatprep.subr.bf16.mxu0 0
        %1144 = vmatpush1.bf16.xpose.msra.mxu0 0
        %1145 = vmatprep.subr.bf16.mxu0 0
        %1146 = vmatpush1.bf16.xpose.msra.mxu0 0
        %1147 = vmatprep.subr.bf16.mxu0 0
        %1148 = vmatpush1.bf16.xpose.msra.mxu0 0
        %1149 = vmatprep.subr.bf16.mxu0 0
        %1150 = vmatpush1.bf16.xpose.msra.mxu0 0
        %1151 = vmatprep.subr.bf16.mxu0 0
        %1152 = vmatpush1.bf16.xpose.msra.mxu0 0
        %1153 = vmatprep.subr.bf16.mxu0 0
        %1154 = vmatpush1.bf16.xpose.msra.mxu0 0
        %1155 = vmatprep.subr.bf16.mxu0 0
        %1156 = vmatpush1.bf16.xpose.msra.mxu0 0
        %1157 = vmatprep.mubr.bf16.mxu0 0
        %1158 = vmatmul.mubr.bf16.gmra.mrb[0].mxu0 %v1023
        %v1159 = vpop.f32.mrb[0].mxu0
        %v1160 = vadd.f32 0.0, %v1159
        %v1161 = vpop.f32.mrb[0].mxu0
        %v1162 = vpop.f32.mrb[0].mxu0
        %v1163 = vpop.f32.mrb[0].mxu0
        %1164 = vdwg.mxu0
        %v1165 = vmul.f32 %v1160, 0.17677669
        %v1166 = vsel %vm552, %v1165, -1e+30
        %v1167 = vsel %vm716, %v1166, -inf
        %1168 = vmax.xlane.f32.xlu0 %v1167
        %v1169 = vpop.xlane.xlu0 %1168
        %v1170 = vsub.f32 %v1166, %v1169
        %v1171 = vmul.f32 %v1170, 1.442695
        %v1172 = vpow.pop %v1171
        %v1173 = vsel %vm716, %v1172, 0.0
        %1174 = vadd.xlane.f32.xlu0 %v1173
        %v1175 = vpop.xlane.xlu0 %1174
        %v1176 = vpack.c.bf16 %v1172, %v1172
        %v1177 = vpack.c.bf16 %v1116, %v1116
        %v1179 = vsel %vm716, %v1176, 0
        %v1182 = vsel %vm731, %v1177, 0
        %1184 = vmatprep.subr.bf16.mxu0 0
        %1185 = vmatpush1.bf16.msra.mxu0 %v1182
        %1186 = vmatprep.subr.bf16.mxu0 0
        %1187 = vmatpush1.bf16.msra.mxu0 0
        %1188 = vmatprep.subr.bf16.mxu0 0
        %1189 = vmatpush1.bf16.msra.mxu0 0
        %1190 = vmatprep.subr.bf16.mxu0 0
        %1191 = vmatpush1.bf16.msra.mxu0 0
        %1192 = vmatprep.subr.bf16.mxu0 0
        %1193 = vmatpush1.bf16.msra.mxu0 0
        %1194 = vmatprep.subr.bf16.mxu0 0
        %1195 = vmatpush1.bf16.msra.mxu0 0
        %1196 = vmatprep.subr.bf16.mxu0 0
        %1197 = vmatpush1.bf16.msra.mxu0 0
        %1198 = vmatprep.subr.bf16.mxu0 0
        %1199 = vmatpush1.bf16.msra.mxu0 0
        %1200 = vmatprep.subr.bf16.mxu0 0
        %1201 = vmatpush1.bf16.msra.mxu0 0
        %1202 = vmatprep.subr.bf16.mxu0 0
        %1203 = vmatpush1.bf16.msra.mxu0 0
        %1204 = vmatprep.subr.bf16.mxu0 0
        %1205 = vmatpush1.bf16.msra.mxu0 0
        %1206 = vmatprep.subr.bf16.mxu0 0
        %1207 = vmatpush1.bf16.msra.mxu0 0
        %1208 = vmatprep.subr.bf16.mxu0 0
        %1209 = vmatpush1.bf16.msra.mxu0 0
        %1210 = vmatprep.subr.bf16.mxu0 0
        %1211 = vmatpush1.bf16.msra.mxu0 0
        %1212 = vmatprep.subr.bf16.mxu0 0
        %1213 = vmatpush1.bf16.msra.mxu0 0
        %1214 = vmatprep.subr.bf16.mxu0 0
        %1215 = vmatpush1.bf16.msra.mxu0 0
        %1216 = vmatprep.mubr.bf16.mxu0 0
        %1217 = vmatmul.mubr.bf16.gmra.mrb[0].mxu0 %v1179
        %v1218 = vpop.f32.mrb[0].mxu0
        %v1219 = vadd.f32 0.0, %v1218
        %v1220 = vpop.f32.mrb[0].mxu0
        %v1221 = vpop.f32.mrb[0].mxu0
        %v1222 = vpop.f32.mrb[0].mxu0
        %1223 = vdwg.mxu0
        %v1224 = vrcp.pop %v1175
        %v1225 = vmul.f32 %v1219, %v1224
        %v1226 = vpack.c.bf16 %v1225, %v1225
        %v1227 = vld [vmem:[#allocation16] sm:$0xf]
        %v1228 = vld [vmem:[#allocation16 + $0x4] sm:$0xf]
        %v1229 = vld [vmem:[#allocation16 + $0x8] sm:$0xf]
        %v1230 = vld [vmem:[#allocation16 + $0xc] sm:$0xf]
        %v1235 = vunpack.c.l.b16 %v1227
        %v1236 = vunpack.c.l.b16 %v1228
        %v1237 = vunpack.c.l.b16 %v1229
        %v1238 = vunpack.c.l.b16 %v1230
        %v1239 = vpack.c.b16 %v1236, %v1235
        %v1240 = vpack.c.b16 %v1238, %v1237
        %v1244 = vsel %vm570, %v1226, 0
        %1246 = vmatprep.subr.bf16.mxu0 0
        %1247 = vmatpush1.bf16.msra.mxu0 %v1239
        %1248 = vmatprep.subr.bf16.mxu0 0
        %1249 = vmatpush1.bf16.msra.mxu0 %v1240
        %1250 = vmatprep.subr.bf16.mxu0 0
        %1251 = vmatpush1.bf16.msra.mxu0 0
        %1252 = vmatprep.subr.bf16.mxu0 0
        %1253 = vmatpush1.bf16.msra.mxu0 0
        %1254 = vmatprep.subr.bf16.mxu0 0
        %1255 = vmatpush1.bf16.msra.mxu0 0
        %1256 = vmatprep.subr.bf16.mxu0 0
        %1257 = vmatpush1.bf16.msra.mxu0 0
        %1258 = vmatprep.subr.bf16.mxu0 0
        %1259 = vmatpush1.bf16.msra.mxu0 0
        %1260 = vmatprep.subr.bf16.mxu0 0
        %1261 = vmatpush1.bf16.msra.mxu0 0
        %1262 = vmatprep.subr.bf16.mxu0 0
        %1263 = vmatpush1.bf16.msra.mxu0 0
        %1264 = vmatprep.subr.bf16.mxu0 0
        %1265 = vmatpush1.bf16.msra.mxu0 0
        %1266 = vmatprep.subr.bf16.mxu0 0
        %1267 = vmatpush1.bf16.msra.mxu0 0
        %1268 = vmatprep.subr.bf16.mxu0 0
        %1269 = vmatpush1.bf16.msra.mxu0 0
        %1270 = vmatprep.subr.bf16.mxu0 0
        %1271 = vmatpush1.bf16.msra.mxu0 0
        %1272 = vmatprep.subr.bf16.mxu0 0
        %1273 = vmatpush1.bf16.msra.mxu0 0
        %1274 = vmatprep.subr.bf16.mxu0 0
        %1275 = vmatpush1.bf16.msra.mxu0 0
        %1276 = vmatprep.subr.bf16.mxu0 0
        %1277 = vmatpush1.bf16.msra.mxu0 0
        %1278 = vmatprep.mubr.bf16.mxu0 0
        %1279 = vmatmul.mubr.bf16.gmra.mrb[0].mxu0 %v1244
        %v1280 = vpop.f32.mrb[0].mxu0
        %v1281 = vadd.f32 0.0, %v1280
        %v1282 = vpop.f32.mrb[0].mxu0
        %v1283 = vpop.f32.mrb[0].mxu0
        %v1284 = vpop.f32.mrb[0].mxu0
        %1285 = vdwg.mxu0
        %v1286 = vadd.f32 %v1004, %v1281
        %v1287 = vpack.c.bf16 %v1286, %v1286
        %v1288 = vld [vmem:[#allocation17] sm:$0xf]
        %v1289 = vld [vmem:[#allocation17 + $0x4] sm:$0xf]
        %v1290 = vld [vmem:[#allocation17 + $0x8] sm:$0xf]
        %v1291 = vld [vmem:[#allocation17 + $0xc] sm:$0xf]
        %v1296 = vunpack.c.l.b16 %v1288
        %v1297 = vunpack.c.l.b16 %v1289
        %v1298 = vunpack.c.l.b16 %v1290
        %v1299 = vunpack.c.l.b16 %v1291
        %v1300 = vpack.c.b16 %v1297, %v1296
        %v1301 = vpack.c.b16 %v1299, %v1298
        %v1305 = vsel %vm570, %v1287, 0
        %1307 = vmatprep.subr.bf16.mxu0 0
        %1308 = vmatpush1.bf16.msra.mxu0 %v1300
        %1309 = vmatprep.subr.bf16.mxu0 0
        %1310 = vmatpush1.bf16.msra.mxu0 %v1301
        %1311 = vmatprep.subr.bf16.mxu0 0
        %1312 = vmatpush1.bf16.msra.mxu0 0
        %1313 = vmatprep.subr.bf16.mxu0 0
        %1314 = vmatpush1.bf16.msra.mxu0 0
        %1315 = vmatprep.subr.bf16.mxu0 0
        %1316 = vmatpush1.bf16.msra.mxu0 0
        %1317 = vmatprep.subr.bf16.mxu0 0
        %1318 = vmatpush1.bf16.msra.mxu0 0
        %1319 = vmatprep.subr.bf16.mxu0 0
        %1320 = vmatpush1.bf16.msra.mxu0 0
        %1321 = vmatprep.subr.bf16.mxu0 0
        %1322 = vmatpush1.bf16.msra.mxu0 0
        %1323 = vmatprep.subr.bf16.mxu0 0
        %1324 = vmatpush1.bf16.msra.mxu0 0
        %1325 = vmatprep.subr.bf16.mxu0 0
        %1326 = vmatpush1.bf16.msra.mxu0 0
        %1327 = vmatprep.subr.bf16.mxu0 0
        %1328 = vmatpush1.bf16.msra.mxu0 0
        %1329 = vmatprep.subr.bf16.mxu0 0
        %1330 = vmatpush1.bf16.msra.mxu0 0
        %1331 = vmatprep.subr.bf16.mxu0 0
        %1332 = vmatpush1.bf16.msra.mxu0 0
        %1333 = vmatprep.subr.bf16.mxu0 0
        %1334 = vmatpush1.bf16.msra.mxu0 0
        %1335 = vmatprep.subr.bf16.mxu0 0
        %1336 = vmatpush1.bf16.msra.mxu0 0
        %1337 = vmatprep.subr.bf16.mxu0 0
        %1338 = vmatpush1.bf16.msra.mxu0 0
        %1339 = vmatprep.mubr.bf16.mxu0 0
        %1340 = vmatmul.mubr.bf16.gmra.mrb[0].mxu0 %v1305
        %v1341 = vpop.f32.mrb[0].mxu0
        %v1342 = vadd.f32 0.0, %v1341
        %v1343 = vpop.f32.mrb[0].mxu0
        %v1344 = vpop.f32.mrb[0].mxu0
        %v1345 = vpop.f32.mrb[0].mxu0
        %1346 = vdwg.mxu0
        %v1347 = vmax.f32 %v1342, 0.0
        %v1348 = vpack.c.bf16 %v1347, %v1347
        %v1349 = vld [vmem:[#allocation19] sm:$0xf]
        %v1350 = vld [vmem:[#allocation19 + $0x4] sm:$0xf]
        %v1351 = vld [vmem:[#allocation19 + $0x8] sm:$0xf]
        %v1352 = vld [vmem:[#allocation19 + $0xc] sm:$0xf]
        %v1353 = vld [vmem:[#allocation19 + $0x10] sm:$0xf]
        %v1354 = vld [vmem:[#allocation19 + $0x14] sm:$0xf]
        %v1355 = vld [vmem:[#allocation19 + $0x18] sm:$0xf]
        %v1356 = vld [vmem:[#allocation19 + $0x1c] sm:$0xf]
        %v1357 = vld [vmem:[#allocation19 + $0x20] sm:$0xf]
        %v1358 = vld [vmem:[#allocation19 + $0x24] sm:$0xf]
        %v1359 = vld [vmem:[#allocation19 + $0x28] sm:$0xf]
        %v1360 = vld [vmem:[#allocation19 + $0x2c] sm:$0xf]
        %v1361 = vld [vmem:[#allocation19 + $0x30] sm:$0xf]
        %v1362 = vld [vmem:[#allocation19 + $0x34] sm:$0xf]
        %v1363 = vld [vmem:[#allocation19 + $0x38] sm:$0xf]
        %v1364 = vld [vmem:[#allocation19 + $0x3c] sm:$0xf]
        %v1381 = vunpack.c.l.b16 %v1349
        %v1382 = vunpack.c.l.b16 %v1350
        %v1383 = vunpack.c.l.b16 %v1351
        %v1384 = vunpack.c.l.b16 %v1352
        %v1385 = vunpack.c.l.b16 %v1353
        %v1386 = vunpack.c.l.b16 %v1354
        %v1387 = vunpack.c.l.b16 %v1355
        %v1388 = vunpack.c.l.b16 %v1356
        %v1389 = vunpack.c.l.b16 %v1357
        %v1390 = vunpack.c.l.b16 %v1358
        %v1391 = vunpack.c.l.b16 %v1359
        %v1392 = vunpack.c.l.b16 %v1360
        %v1393 = vunpack.c.l.b16 %v1361
        %v1394 = vunpack.c.l.b16 %v1362
        %v1395 = vunpack.c.l.b16 %v1363
        %v1396 = vunpack.c.l.b16 %v1364
        %v1397 = vpack.c.b16 %v1382, %v1381
        %v1398 = vpack.c.b16 %v1384, %v1383
        %v1399 = vpack.c.b16 %v1386, %v1385
        %v1400 = vpack.c.b16 %v1388, %v1387
        %v1401 = vpack.c.b16 %v1390, %v1389
        %v1402 = vpack.c.b16 %v1392, %v1391
        %v1403 = vpack.c.b16 %v1394, %v1393
        %v1404 = vpack.c.b16 %v1396, %v1395
        %1413 = vmatprep.subr.bf16.mxu0 0
        %1414 = vmatpush1.bf16.msra.mxu0 %v1397
        %1415 = vmatprep.subr.bf16.mxu0 0
        %1416 = vmatpush1.bf16.msra.mxu0 %v1398
        %1417 = vmatprep.subr.bf16.mxu0 0
        %1418 = vmatpush1.bf16.msra.mxu0 %v1399
        %1419 = vmatprep.subr.bf16.mxu0 0
        %1420 = vmatpush1.bf16.msra.mxu0 %v1400
        %1421 = vmatprep.subr.bf16.mxu0 0
        %1422 = vmatpush1.bf16.msra.mxu0 %v1401
        %1423 = vmatprep.subr.bf16.mxu0 0
        %1424 = vmatpush1.bf16.msra.mxu0 %v1402
        %1425 = vmatprep.subr.bf16.mxu0 0
        %1426 = vmatpush1.bf16.msra.mxu0 %v1403
        %1427 = vmatprep.subr.bf16.mxu0 0
        %1428 = vmatpush1.bf16.msra.mxu0 %v1404
        %1429 = vmatprep.subr.bf16.mxu0 0
        %1430 = vmatpush1.bf16.msra.mxu0 0
        %1431 = vmatprep.subr.bf16.mxu0 0
        %1432 = vmatpush1.bf16.msra.mxu0 0
        %1433 = vmatprep.subr.bf16.mxu0 0
        %1434 = vmatpush1.bf16.msra.mxu0 0
        %1435 = vmatprep.subr.bf16.mxu0 0
        %1436 = vmatpush1.bf16.msra.mxu0 0
        %1437 = vmatprep.subr.bf16.mxu0 0
        %1438 = vmatpush1.bf16.msra.mxu0 0
        %1439 = vmatprep.subr.bf16.mxu0 0
        %1440 = vmatpush1.bf16.msra.mxu0 0
        %1441 = vmatprep.subr.bf16.mxu0 0
        %1442 = vmatpush1.bf16.msra.mxu0 0
        %1443 = vmatprep.subr.bf16.mxu0 0
        %1444 = vmatpush1.bf16.msra.mxu0 0
        %1445 = vmatprep.mubr.bf16.mxu0 0
        %1446 = vmatmul.mubr.bf16.gmra.mrb[0].mxu0 %v1348
        %v1447 = vpop.f32.mrb[0].mxu0
        %v1448 = vadd.f32 0.0, %v1447
        %v1449 = vpop.f32.mrb[0].mxu0
        %v1450 = vpop.f32.mrb[0].mxu0
        %v1451 = vpop.f32.mrb[0].mxu0
        %1452 = vdwg.mxu0
        %v1453 = vadd.f32 %v1286, %v1448
        %vm1454 = vcmask 261127
        %1455 = vst.msk [vmem:[%s545 - $0x7] sm:$0x80] %vm1454, %v1453
        %s1456 = sand.u32 %s277, 1
        %s1457 = scalar_lea.sflag [#allocation4], %s1456
        %s1458 = sand.u32 %s277, 1
        %s1459 = scalar_lea.vmem [#allocation20], %s1458
        // Predicated region
        $region109: #{tpu_custom_call.1} parent=63 // pred_check
          %p1460 = pneg %p287
        $region110: #{tpu_custom_call.1} parent=63 // pred_check_branch
          %1462 = sbr.rel (%p1460) target = $region112
        $region111: #{tpu_custom_call.1} parent=63 // pred_region
          %s1464 = ssub.s32 16, 16
          %1465 = vsyncadd %s1457, %s1464
          %s1466 = smul.addr %s33, 16
          %s1467 = scalar_lea.hbm %s11, %s1466
          %s1469 = sshll.u32 %s1459, 4
          %s1470 = int_to_ptr.vmem [resolvable:$true] %s1469
          %1472 = dma.vmem_to_hbm [thread:$0]  %s1470, 16, %s1467, %s1457
        $region112: #{tpu_custom_call.1} parent=63 // pred_fallthru
          _
      $region64: #{tpu_custom_call.1} parent=5 // pred_fallthru
        _
      %p1473 = scmp.le.s32.totalorder 2, %s28
      // Predicated region
      $region113: #{tpu_custom_call.1} parent=5 // pred_check
        %p1474 = pneg %p1473
      $region114: #{tpu_custom_call.1} parent=5 // pred_check_branch
        %1476 = sbr.rel (%p1474) target = $region116
      $region115: #{tpu_custom_call.1} parent=5 // pred_region
        %s1477 = ssub.s32 %s28, 2
        // Predicated region
        $region117: #{tpu_custom_call.1} parent=115 // pred_check
          %p1478 = pneg %p293
        $region118: #{tpu_custom_call.1} parent=115 // pred_check_branch
          %1480 = sbr.rel (%p1478) target = $region120
        $region119: #{tpu_custom_call.1} parent=115 // pred_region
          %s1481 = sand.u32 %s278, 1
          %s1482 = scalar_lea.sflag [#allocation4], %s1481
          %s1483 = sand.u32 %s278, 1
          %s1484 = scalar_lea.vmem [#allocation20], %s1483
          %1485 = dma.done %s1482, 16
        $region120: #{tpu_custom_call.1} parent=115 // pred_fallthru
          _
      $region116: #{tpu_custom_call.1} parent=5 // pred_fallthru
        _
    $region6: #{tpu_custom_call.1} parent=1 // loop_footer
      %s32 = sadd.s32 1, %s28
    $region7: #{tpu_custom_call.1} parent=1 // loop_footer_branch
      %27 = sbr.rel target = $region3
    $region8: #{tpu_custom_call.1} parent=1 // loop_exit
      _
    %1486 = vsyncpa [#allocation3], 1
    %s1487 = scalar_lea.sflag [#allocation3], 1
    %1488 = vsyncpa %s1487, 1
    %1489 = vsyncpa [#allocation6], 1
    %1490 = vsyncpa [#allocation9], 1
    %1491 = vsyncpa [#allocation12], 1
    %1492 = vsyncpa [#allocation15], 1
    %1493 = vsyncpa [#allocation18], 1
    %1494 = vsyncpa [#allocation4], 1
    %s1495 = scalar_lea.sflag [#allocation4], 1
    %1496 = vsyncpa %s1495, 1

</llo_original>
